<compile_context>
chip_gen: v7x
topology: tpu7x:2x2x1
jax: 0.10.0
libtpu: 0.0.40
codegen_flags: <defaults>
</compile_context>

<pallas_src>
from functools import partial

import jax
import jax.numpy as jnp
from jax.experimental import pallas as pl
from jax.experimental.pallas import tpu as pltpu


def _erf(x):
    # float32-accurate erf (Abramowitz & Stegun 7.1.26, |abs err| <= 1.5e-7).
    a1, a2, a3, a4, a5 = (0.254829592, -0.284496736, 1.421413741,
                          -1.453152027, 1.061405429)
    p = 0.3275911
    ax = jnp.abs(x)
    t = 1.0 / (1.0 + p * ax)
    poly = ((((a5 * t + a4) * t + a3) * t + a2) * t + a1) * t
    y = 1.0 - poly * jnp.exp(-(ax * ax))
    return jnp.where(x < 0, -y, y)


def _gelu_exact(x):
    # matches torch.nn.GELU() (approximate='none'): 0.5 * x * (1 + erf(x/sqrt(2)))
    return 0.5 * x * (1.0 + _erf(x * 0.7071067811865476))


def _pick_batch_tile(B):
    # Output block is (tb, 1): tb must be a multiple of 8 or equal B.
    if B > 8 and B % 8 == 0:
        return 8
    return B


def _pick_seq_tile(Sp, tb, Dp, itemsize, L, align):
    # ~4 MiB per pipeline step for all L streamed layer inputs (Pallas double-buffers,
    # so peak streaming VMEM is ~2x this).  Bigger tiles amortize the ~0.35 us/step cost.
    budget = 4 * 1024 * 1024
    max_rows = max(align, budget // max(1, L * tb * Dp * itemsize))
    if Sp <= max_rows:
        return Sp                      # full extent is always a legal block
    best = None
    for ts in range(align, min(Sp, max_rows) + 1, align):
        if Sp % ts == 0:
            best = ts
    return best if best is not None else Sp   # fallback: full extent (bigger VMEM, still correct)


def _make_kernel(L, r, D, S):
    """Kernel factory; L/r/D/S are static (trace-time) Python ints."""
    # S == 1 gives inf/NaN like torch's unbiased std; sane use has S >= 2.
    inv_s = 1.0 / S
    inv_sm1 = 1.0 / (S - 1) if S > 1 else float("nan")

    def kernel(*refs):
        w_ref = refs[0]                       # (L,) f32 in SMEM (softmaxed weights)
        hs_refs = refs[1:1 + L]               # L x (tb, ts, Dp) tiles
        (w1a_ref, w1b_ref, b1_ref,
         w2_ref, b2_ref, w3t_ref, b3_ref) = refs[1 + L:8 + L]
        out_ref = refs[8 + L]                 # (tb, 1)
        sum_sc, sq_sc = refs[9 + L], refs[10 + L]   # (tb, Dp) f32 scratch

        s = pl.program_id(1)

        @pl.when(s == 0)
        def _init():
            sum_sc[...] = jnp.zeros_like(sum_sc)
            sq_sc[...] = jnp.zeros_like(sq_sc)

        # Weighted layer mix for this tile: scalar splat per layer, f32 accumulation.
        acc = hs_refs[0][...].astype(jnp.float32) * w_ref[0]
        for l in range(1, L):
            acc = acc + hs_refs[l][...].astype(jnp.float32) * w_ref[l]

        # Running per-(b, packed-d) sum and sum-of-squares over the sequence axis
        # (sublane reductions -> XLU slot; free relative to the HBM-bound stream).
        sum_sc[...] += jnp.sum(acc, axis=1)
        sq_sc[...] += jnp.sum(acc * acc, axis=1)

        @pl.when(s == pl.num_programs(1) - 1)
        def _finalize():
            def fold(x):                      # (tb, r*D) -> (tb, D): sum the r lane groups
                y = x[:, 0:D]
                for j in range(1, r):
                    y = y + x[:, j * D:(j + 1) * D]
                return y

            total = fold(sum_sc[...])
            totsq = fold(sq_sc[...])
            mean = total * inv_s
            # sum((x-mean)^2) = sumsq - sum*mean ; clamp tiny negative rounding residue.
            var = jnp.maximum(totsq - total * mean, 0.0) * inv_sm1
            std = jnp.sqrt(var)

            # MLP head.  cat([mean, std], -1) @ W1 == mean @ W1[:D] + std @ W1[D:]
            h = (jnp.dot(mean, w1a_ref[...], preferred_element_type=jnp.float32)
                 + jnp.dot(std, w1b_ref[...], preferred_element_type=jnp.float32)
                 + b1_ref[...])
            h = _gelu_exact(h)
            h = jnp.dot(h, w2_ref[...], preferred_element_type=jnp.float32) + b2_ref[...]
            h = _gelu_exact(h)
            # Final (tb,H)@(H,1): VPU multiply + lane reduction instead of an N=1 MXU dot.
            out_ref[...] = (jnp.sum(h * w3t_ref[...], axis=-1, keepdims=True)
                            + b3_ref[...])

    return kernel


@partial(jax.jit, static_argnames=("seq_block_rows",))
def prediction_head(hidden_states, layer_weights, params, seq_block_rows=None):
    """hidden_states: tuple of L arrays (B, S, D) (f32 or bf16). Returns (B,) f32."""
    w1, b1, w2, b2, w3, b3 = params
    L = len(hidden_states)
    B, S, D = hidden_states[0].shape
    H = w2.shape[0]
    f32 = jnp.float32

    # Lane-dense repack: (B, S, D) -> (B, S/r, r*D), a free (contiguous) reshape.
    r = 1
    if D < 128 and 128 % D == 0 and S % (128 // D) == 0:
        r = 128 // D
    Dp, Sp = D * r, S // r
    hs = [h.reshape(B, Sp, Dp) for h in hidden_states]

    itemsize = jnp.dtype(hs[0].dtype).itemsize
    align = 16 if itemsize < 4 else 8
    tb = _pick_batch_tile(B)
    if seq_block_rows is None:
        ts = _pick_seq_tile(Sp, tb, Dp, itemsize, L, align)
    else:
        ts = int(seq_block_rows)
        assert Sp % ts == 0 and (ts == Sp or ts % align == 0), (Sp, ts, align)
    nb, ns = B // tb, Sp // ts

    # O(L) softmax of the layer-mix weights (tiny; see TODO(synk) in the header).
    w_norm = jax.nn.softmax(layer_weights.astype(f32))

    w1a = w1[:D].astype(f32)                        # (D, H)
    w1b = w1[D:].astype(f32)                        # (D, H)
    b1r = b1.reshape(1, H).astype(f32)
    w2f = w2.astype(f32)                            # (H, H)
    b2r = b2.reshape(1, H).astype(f32)
    w3t = w3.reshape(1, H).astype(f32)              # (H, 1) -> (1, H) row
    b3r = b3.reshape(1, 1).astype(f32)

    hs_spec = pl.BlockSpec((tb, ts, Dp), lambda b, s: (b, s, 0))

    def const_spec(shape):                          # VMEM-resident params (block index fixed)
        return pl.BlockSpec(shape, lambda b, s: (0,) * len(shape))

    in_specs = ([pl.BlockSpec(memory_space=pltpu.MemorySpace.SMEM)]   # (L,) weights
                + [hs_spec] * L
                + [const_spec((D, H)), const_spec((D, H)), const_spec((1, H)),
                   const_spec((H, H)), const_spec((1, H)),
                   const_spec((1, H)), const_spec((1, 1))])
    out_spec = pl.BlockSpec((tb, 1), lambda b, s: (b, 0))

    out = pl.pallas_call(
        _make_kernel(L, r, D, S),
        out_shape=jax.ShapeDtypeStruct((B, 1), f32),
        grid_spec=pltpu.PrefetchScalarGridSpec(
            num_scalar_prefetch=0,
            grid=(nb, ns),
            in_specs=in_specs,
            out_specs=out_spec,
            scratch_shapes=[pltpu.VMEM((tb, Dp), f32),     # running sum
                            pltpu.VMEM((tb, Dp), f32)]),   # running sum of squares
        compiler_params=pltpu.CompilerParams(
            dimension_semantics=("parallel", "arbitrary"),
            vmem_limit_bytes=48 * 1024 * 1024),
    )(w_norm, *hs, w1a, w1b, b1r, w2f, b2r, w3t, b3r)
    return out.reshape(B)


if __name__ == "__main__":
    # num_input_layers, batch, seq, input_size, hidden_size (num_layer = 2)
    L, B, S, D, H = 4, 16, 128, 32, 32

    key = jax.random.PRNGKey(0)
    keys = jax.random.split(key, L + 7)

    # Hidden states stored bf16 in HBM (half the streamed bytes); kernel upcasts per tile.
    hidden_states = tuple(
        jax.random.normal(keys[i], (B, S, D), jnp.float32).astype(jnp.bfloat16)
        for i in range(L))
    # module init is zeros(L); use small deterministic values to exercise the softmax
    layer_weights = 0.1 * jax.random.normal(keys[L], (L,), jnp.float32)

    w1 = jax.random.normal(keys[L + 1], (2 * D, H), jnp.float32) / jnp.sqrt(2.0 * D)
    b1 = 0.01 * jax.random.normal(keys[L + 2], (H,), jnp.float32)
    w2 = jax.random.normal(keys[L + 3], (H, H), jnp.float32) / jnp.sqrt(1.0 * H)
    b2 = 0.01 * jax.random.normal(keys[L + 4], (H,), jnp.float32)
    w3 = jax.random.normal(keys[L + 5], (H, 1), jnp.float32) / jnp.sqrt(1.0 * H)
    b3 = 0.01 * jax.random.normal(keys[L + 6], (1,), jnp.float32)
    params = (w1, b1, w2, b2, w3, b3)

    # seq_block_rows=16 forces 2 sequence steps (and tb=8 gives 2 batch tiles) so the
    # streaming accumulation + finalize path is actually exercised at this small size.
    pred = jax.block_until_ready(
        prediction_head(hidden_states, layer_weights, params, seq_block_rows=16))

    # pure-JAX reference with the exact module semantics (f32 compute on the bf16 values)
    def ref(hstates, lw, ps):
        rw1, rb1, rw2, rb2, rw3, rb3 = ps
        w = jax.nn.softmax(lw.astype(jnp.float32))
        hsf = jnp.stack([h.astype(jnp.float32) for h in hstates], 0)
        hsum = jnp.sum(w[:, None, None, None] * hsf, axis=0)
        mean = jnp.mean(hsum, axis=1)
        std = jnp.std(hsum, axis=1, ddof=1)
        h = jnp.concatenate([mean, std], axis=1)
        h = jax.nn.gelu(h @ rw1 + rb1, approximate=False)
        h = jax.nn.gelu(h @ rw2 + rb2, approximate=False)
        return (h @ rw3 + rb3).reshape(hsum.shape[0])

    expected = ref(hidden_states, layer_weights, params)
    assert pred.shape == (B,), pred.shape
    assert jnp.allclose(pred, expected, atol=1e-4, rtol=1e-4), (pred, expected)
    print("KERNEL_OK")
</pallas_src>

<mosaic_0001>
module attributes {stable_mosaic.version = 11 : i64} {
  func.func @kernel(%arg0: i32, %arg1: i32, %arg2: memref<4xf32, #tpu.memory_space<smem>>, %arg3: memref<8x16x128xbf16, #tpu.memory_space<vmem>>, %arg4: memref<8x16x128xbf16, #tpu.memory_space<vmem>>, %arg5: memref<8x16x128xbf16, #tpu.memory_space<vmem>>, %arg6: memref<8x16x128xbf16, #tpu.memory_space<vmem>>, %arg7: memref<32x32xf32, #tpu.memory_space<vmem>>, %arg8: memref<32x32xf32, #tpu.memory_space<vmem>>, %arg9: memref<1x32xf32, #tpu.memory_space<vmem>>, %arg10: memref<32x32xf32, #tpu.memory_space<vmem>>, %arg11: memref<1x32xf32, #tpu.memory_space<vmem>>, %arg12: memref<1x32xf32, #tpu.memory_space<vmem>>, %arg13: memref<1x1xf32, #tpu.memory_space<vmem>>, %arg14: memref<8x1xf32, #tpu.memory_space<vmem>>, %arg15: memref<8x128xf32, #tpu.memory_space<vmem>>, %arg16: memref<8x128xf32, #tpu.memory_space<vmem>>) attributes {dimension_semantics = [#tpu.dimension_semantics<parallel>, #tpu.dimension_semantics<arbitrary>], iteration_bounds = array<i64: 2, 2>, scalar_prefetch = 0 : i64, scratch_operands = 2 : i64, tpu.core_type = #tpu.core_type<tc>, window_params = [{transform_indices = @transform_0, window_bounds = array<i64: 4>}, {transform_indices = @transform_1, window_bounds = array<i64: 8, 16, 128>}, {transform_indices = @transform_2, window_bounds = array<i64: 8, 16, 128>}, {transform_indices = @transform_3, window_bounds = array<i64: 8, 16, 128>}, {transform_indices = @transform_4, window_bounds = array<i64: 8, 16, 128>}, {pipeline_mode = #tpu.pipeline_mode<synchronous>, transform_indices = @transform_5, window_bounds = array<i64: 32, 32>}, {pipeline_mode = #tpu.pipeline_mode<synchronous>, transform_indices = @transform_6, window_bounds = array<i64: 32, 32>}, {pipeline_mode = #tpu.pipeline_mode<synchronous>, transform_indices = @transform_7, window_bounds = array<i64: 1, 32>}, {pipeline_mode = #tpu.pipeline_mode<synchronous>, transform_indices = @transform_8, window_bounds = array<i64: 32, 32>}, {pipeline_mode = #tpu.pipeline_mode<synchronous>, transform_indices = @transform_9, window_bounds = array<i64: 1, 32>}, {pipeline_mode = #tpu.pipeline_mode<synchronous>, transform_indices = @transform_10, window_bounds = array<i64: 1, 32>}, {pipeline_mode = #tpu.pipeline_mode<synchronous>, transform_indices = @transform_11, window_bounds = array<i64: 1, 1>}, {transform_indices = @transform_12, window_bounds = array<i64: 8, 1>}]} {
    %c0_i32 = arith.constant 0 : i32
    %0 = arith.cmpi eq, %arg1, %c0_i32 : i32
    %1 = arith.extui %0 : i1 to i32
    %c0_i32_0 = arith.constant 0 : i32
    %2 = arith.cmpi ne, %1, %c0_i32_0 : i32
    scf.if %2 {
      %cst_23 = arith.constant 0.000000e+00 : f32
      %38 = vector.broadcast %cst_23 : f32 to vector<8x128xf32>
      %c0_24 = arith.constant 0 : index
      %c0_25 = arith.constant 0 : index
      %39 = vector.load %arg15[%c0_24, %c0_25] : memref<8x128xf32, #tpu.memory_space<vmem>>, vector<8x128xf32>
      tpu.vector_store %arg15[%c0_24, %c0_25], %38 {strides = array<i32>} : memref<8x128xf32, #tpu.memory_space<vmem>>, vector<8x128xf32>,
      %cst_26 = arith.constant 0.000000e+00 : f32
      %40 = vector.broadcast %cst_26 : f32 to vector<8x128xf32>
      %c0_27 = arith.constant 0 : index
      %c0_28 = arith.constant 0 : index
      %41 = vector.load %arg16[%c0_27, %c0_28] : memref<8x128xf32, #tpu.memory_space<vmem>>, vector<8x128xf32>
      tpu.vector_store %arg16[%c0_27, %c0_28], %40 {strides = array<i32>} : memref<8x128xf32, #tpu.memory_space<vmem>>, vector<8x128xf32>,
    } else {
    }
    %c0 = arith.constant 0 : index
    %c0_1 = arith.constant 0 : index
    %c0_2 = arith.constant 0 : index
    %3 = vector.load %arg3[%c0, %c0_1, %c0_2] : memref<8x16x128xbf16, #tpu.memory_space<vmem>>, vector<8x16x128xbf16>
    %4 = arith.extf %3 : vector<8x16x128xbf16> to vector<8x16x128xf32>
    %c0_3 = arith.constant 0 : index
    %5 = memref.load %arg2[%c0_3] : memref<4xf32, #tpu.memory_space<smem>>
    %6 = vector.broadcast %5 : f32 to vector<8x16x128xf32>
    %7 = arith.mulf %4, %6 : vector<8x16x128xf32>
    %c0_4 = arith.constant 0 : index
    %c0_5 = arith.constant 0 : index
    %c0_6 = arith.constant 0 : index
    %8 = vector.load %arg4[%c0_4, %c0_5, %c0_6] : memref<8x16x128xbf16, #tpu.memory_space<vmem>>, vector<8x16x128xbf16>
    %9 = arith.extf %8 : vector<8x16x128xbf16> to vector<8x16x128xf32>
    %c1 = arith.constant 1 : index
    %10 = memref.load %arg2[%c1] : memref<4xf32, #tpu.memory_space<smem>>
    %11 = vector.broadcast %10 : f32 to vector<8x16x128xf32>
    %12 = arith.mulf %9, %11 : vector<8x16x128xf32>
    %13 = arith.addf %7, %12 : vector<8x16x128xf32>
    %c0_7 = arith.constant 0 : index
    %c0_8 = arith.constant 0 : index
    %c0_9 = arith.constant 0 : index
    %14 = vector.load %arg5[%c0_7, %c0_8, %c0_9] : memref<8x16x128xbf16, #tpu.memory_space<vmem>>, vector<8x16x128xbf16>
    %15 = arith.extf %14 : vector<8x16x128xbf16> to vector<8x16x128xf32>
    %c2 = arith.constant 2 : index
    %16 = memref.load %arg2[%c2] : memref<4xf32, #tpu.memory_space<smem>>
    %17 = vector.broadcast %16 : f32 to vector<8x16x128xf32>
    %18 = arith.mulf %15, %17 : vector<8x16x128xf32>
    %19 = arith.addf %13, %18 : vector<8x16x128xf32>
    %c0_10 = arith.constant 0 : index
    %c0_11 = arith.constant 0 : index
    %c0_12 = arith.constant 0 : index
    %20 = vector.load %arg6[%c0_10, %c0_11, %c0_12] : memref<8x16x128xbf16, #tpu.memory_space<vmem>>, vector<8x16x128xbf16>
    %21 = arith.extf %20 : vector<8x16x128xbf16> to vector<8x16x128xf32>
    %c3 = arith.constant 3 : index
    %22 = memref.load %arg2[%c3] : memref<4xf32, #tpu.memory_space<smem>>
    %23 = vector.broadcast %22 : f32 to vector<8x16x128xf32>
    %24 = arith.mulf %21, %23 : vector<8x16x128xf32>
    %25 = arith.addf %19, %24 : vector<8x16x128xf32>
    %c0_13 = arith.constant 0 : index
    %c0_14 = arith.constant 0 : index
    %26 = vector.load %arg15[%c0_13, %c0_14] : memref<8x128xf32, #tpu.memory_space<vmem>>, vector<8x128xf32>
    %cst = arith.constant dense<0.000000e+00> : vector<8x128xf32>
    %27 = vector.multi_reduction <add>, %25, %cst [1] : vector<8x16x128xf32> to vector<8x128xf32>
    %28 = arith.addf %26, %27 : vector<8x128xf32>
    %c0_15 = arith.constant 0 : index
    %c0_16 = arith.constant 0 : index
    %29 = vector.load %arg15[%c0_15, %c0_16] : memref<8x128xf32, #tpu.memory_space<vmem>>, vector<8x128xf32>
    tpu.vector_store %arg15[%c0_15, %c0_16], %28 {strides = array<i32>} : memref<8x128xf32, #tpu.memory_space<vmem>>, vector<8x128xf32>,
    %c0_17 = arith.constant 0 : index
    %c0_18 = arith.constant 0 : index
    %30 = vector.load %arg16[%c0_17, %c0_18] : memref<8x128xf32, #tpu.memory_space<vmem>>, vector<8x128xf32>
    %31 = arith.mulf %25, %25 : vector<8x16x128xf32>
    %cst_19 = arith.constant dense<0.000000e+00> : vector<8x128xf32>
    %32 = vector.multi_reduction <add>, %31, %cst_19 [1] : vector<8x16x128xf32> to vector<8x128xf32>
    %33 = arith.addf %30, %32 : vector<8x128xf32>
    %c0_20 = arith.constant 0 : index
    %c0_21 = arith.constant 0 : index
    %34 = vector.load %arg16[%c0_20, %c0_21] : memref<8x128xf32, #tpu.memory_space<vmem>>, vector<8x128xf32>
    tpu.vector_store %arg16[%c0_20, %c0_21], %33 {strides = array<i32>} : memref<8x128xf32, #tpu.memory_space<vmem>>, vector<8x128xf32>,
    %c1_i32 = arith.constant 1 : i32
    %35 = arith.cmpi eq, %arg1, %c1_i32 : i32
    %36 = arith.extui %35 : i1 to i32
    %c0_i32_22 = arith.constant 0 : i32
    %37 = arith.cmpi ne, %36, %c0_i32_22 : i32
    scf.if %37 {
      %c0_23 = arith.constant 0 : index
      %c0_24 = arith.constant 0 : index
      %38 = vector.load %arg15[%c0_23, %c0_24] : memref<8x128xf32, #tpu.memory_space<vmem>>, vector<8x128xf32>
      %39 = vector.extract_strided_slice %38 {offsets = [0, 0], sizes = [8, 32], strides = [1, 1]} : vector<8x128xf32> to vector<8x32xf32>
      %40 = vector.extract_strided_slice %38 {offsets = [0, 32], sizes = [8, 32], strides = [1, 1]} : vector<8x128xf32> to vector<8x32xf32>
      %41 = arith.addf %39, %40 : vector<8x32xf32>
      %42 = vector.extract_strided_slice %38 {offsets = [0, 64], sizes = [8, 32], strides = [1, 1]} : vector<8x128xf32> to vector<8x32xf32>
      %43 = arith.addf %41, %42 : vector<8x32xf32>
      %44 = vector.extract_strided_slice %38 {offsets = [0, 96], sizes = [8, 32], strides = [1, 1]} : vector<8x128xf32> to vector<8x32xf32>
      %45 = arith.addf %43, %44 : vector<8x32xf32>
      %c0_25 = arith.constant 0 : index
      %c0_26 = arith.constant 0 : index
      %46 = vector.load %arg16[%c0_25, %c0_26] : memref<8x128xf32, #tpu.memory_space<vmem>>, vector<8x128xf32>
      %47 = vector.extract_strided_slice %46 {offsets = [0, 0], sizes = [8, 32], strides = [1, 1]} : vector<8x128xf32> to vector<8x32xf32>
      %48 = vector.extract_strided_slice %46 {offsets = [0, 32], sizes = [8, 32], strides = [1, 1]} : vector<8x128xf32> to vector<8x32xf32>
      %49 = arith.addf %47, %48 : vector<8x32xf32>
      %50 = vector.extract_strided_slice %46 {offsets = [0, 64], sizes = [8, 32], strides = [1, 1]} : vector<8x128xf32> to vector<8x32xf32>
      %51 = arith.addf %49, %50 : vector<8x32xf32>
      %52 = vector.extract_strided_slice %46 {offsets = [0, 96], sizes = [8, 32], strides = [1, 1]} : vector<8x128xf32> to vector<8x32xf32>
      %53 = arith.addf %51, %52 : vector<8x32xf32>
      %cst_27 = arith.constant 7.812500e-03 : f32
      %54 = vector.broadcast %cst_27 : f32 to vector<8x32xf32>
      %55 = arith.mulf %45, %54 : vector<8x32xf32>
      %56 = arith.mulf %45, %55 : vector<8x32xf32>
      %57 = arith.subf %53, %56 : vector<8x32xf32>
      %cst_28 = arith.constant 0.000000e+00 : f32
      %58 = vector.broadcast %cst_28 : f32 to vector<8x32xf32>
      %59 = arith.maximumf %57, %58 : vector<8x32xf32>
      %cst_29 = arith.constant 0.00787401571 : f32
      %60 = vector.broadcast %cst_29 : f32 to vector<8x32xf32>
      %61 = arith.mulf %59, %60 : vector<8x32xf32>
      %62 = math.sqrt %61 : vector<8x32xf32>
      %c0_30 = arith.constant 0 : index
      %c0_31 = arith.constant 0 : index
      %63 = vector.load %arg7[%c0_30, %c0_31] : memref<32x32xf32, #tpu.memory_space<vmem>>, vector<32x32xf32>
      %cst_32 = arith.constant dense<0.000000e+00> : vector<8x32xf32>
      %64 = tpu.matmul %55, %63, %cst_32 {dimension_numbers = #tpu.dot_dimension_numbers<[1], [0], [0], [1], [0, 0, 1, 1], [], []>} : vector<8x32xf32>, vector<32x32xf32>, vector<8x32xf32> -> vector<8x32xf32>
      %c0_33 = arith.constant 0 : index
      %c0_34 = arith.constant 0 : index
      %65 = vector.load %arg8[%c0_33, %c0_34] : memref<32x32xf32, #tpu.memory_space<vmem>>, vector<32x32xf32>
      %cst_35 = arith.constant dense<0.000000e+00> : vector<8x32xf32>
      %66 = tpu.matmul %62, %65, %cst_35 {dimension_numbers = #tpu.dot_dimension_numbers<[1], [0], [0], [1], [0, 0, 1, 1], [], []>} : vector<8x32xf32>, vector<32x32xf32>, vector<8x32xf32> -> vector<8x32xf32>
      %67 = arith.addf %64, %66 : vector<8x32xf32>
      %c0_36 = arith.constant 0 : index
      %c0_37 = arith.constant 0 : index
      %68 = vector.load %arg9[%c0_36, %c0_37] : memref<1x32xf32, #tpu.memory_space<vmem>>, vector<1x32xf32>
      %69 = vector.broadcast %68 : vector<1x32xf32> to vector<8x32xf32>
      %70 = arith.addf %67, %69 : vector<8x32xf32>
      %cst_38 = arith.constant 5.000000e-01 : f32
      %71 = vector.broadcast %cst_38 : f32 to vector<8x32xf32>
      %72 = arith.mulf %71, %70 : vector<8x32xf32>
      %cst_39 = arith.constant 0.707106769 : f32
      %73 = vector.broadcast %cst_39 : f32 to vector<8x32xf32>
      %74 = arith.mulf %70, %73 : vector<8x32xf32>
      %75 = math.absf %74 : vector<8x32xf32>
      %cst_40 = arith.constant 0.327591091 : f32
      %76 = vector.broadcast %cst_40 : f32 to vector<8x32xf32>
      %77 = arith.mulf %76, %75 : vector<8x32xf32>
      %cst_41 = arith.constant 1.000000e+00 : f32
      %78 = vector.broadcast %cst_41 : f32 to vector<8x32xf32>
      %79 = arith.addf %78, %77 : vector<8x32xf32>
      %cst_42 = arith.constant 1.000000e+00 : f32
      %80 = vector.broadcast %cst_42 : f32 to vector<8x32xf32>
      %81 = arith.divf %80, %79 : vector<8x32xf32>
      %cst_43 = arith.constant 1.06140542 : f32
      %82 = vector.broadcast %cst_43 : f32 to vector<8x32xf32>
      %83 = arith.mulf %82, %81 : vector<8x32xf32>
      %cst_44 = arith.constant -1.45315206 : f32
      %84 = vector.broadcast %cst_44 : f32 to vector<8x32xf32>
      %85 = arith.addf %83, %84 : vector<8x32xf32>
      %86 = arith.mulf %85, %81 : vector<8x32xf32>
      %cst_45 = arith.constant 1.42141378 : f32
      %87 = vector.broadcast %cst_45 : f32 to vector<8x32xf32>
      %88 = arith.addf %86, %87 : vector<8x32xf32>
      %89 = arith.mulf %88, %81 : vector<8x32xf32>
      %cst_46 = arith.constant -0.284496725 : f32
      %90 = vector.broadcast %cst_46 : f32 to vector<8x32xf32>
      %91 = arith.addf %89, %90 : vector<8x32xf32>
      %92 = arith.mulf %91, %81 : vector<8x32xf32>
      %cst_47 = arith.constant 0.254829586 : f32
      %93 = vector.broadcast %cst_47 : f32 to vector<8x32xf32>
      %94 = arith.addf %92, %93 : vector<8x32xf32>
      %95 = arith.mulf %94, %81 : vector<8x32xf32>
      %96 = arith.mulf %75, %75 : vector<8x32xf32>
      %cst_48 = arith.constant 0.000000e+00 : f32
      %97 = vector.broadcast %cst_48 : f32 to vector<8x32xf32>
      %98 = arith.subf %97, %96 : vector<8x32xf32>
      %99 = math.exp %98 : vector<8x32xf32>
      %100 = arith.mulf %95, %99 : vector<8x32xf32>
      %cst_49 = arith.constant 1.000000e+00 : f32
      %101 = vector.broadcast %cst_49 : f32 to vector<8x32xf32>
      %102 = arith.subf %101, %100 : vector<8x32xf32>
      %cst_50 = arith.constant 0.000000e+00 : f32
      %103 = vector.broadcast %cst_50 : f32 to vector<8x32xf32>
      %104 = arith.cmpf olt, %74, %103 : vector<8x32xf32>
      %cst_51 = arith.constant 0.000000e+00 : f32
      %105 = vector.broadcast %cst_51 : f32 to vector<8x32xf32>
      %106 = arith.subf %105, %102 : vector<8x32xf32>
      %107 = arith.select %104, %106, %102 : vector<8x32xi1>, vector<8x32xf32>
      %cst_52 = arith.constant 1.000000e+00 : f32
      %108 = vector.broadcast %cst_52 : f32 to vector<8x32xf32>
      %109 = arith.addf %108, %107 : vector<8x32xf32>
      %110 = arith.mulf %72, %109 : vector<8x32xf32>
      %c0_53 = arith.constant 0 : index
      %c0_54 = arith.constant 0 : index
      %111 = vector.load %arg10[%c0_53, %c0_54] : memref<32x32xf32, #tpu.memory_space<vmem>>, vector<32x32xf32>
      %cst_55 = arith.constant dense<0.000000e+00> : vector<8x32xf32>
      %112 = tpu.matmul %110, %111, %cst_55 {dimension_numbers = #tpu.dot_dimension_numbers<[1], [0], [0], [1], [0, 0, 1, 1], [], []>} : vector<8x32xf32>, vector<32x32xf32>, vector<8x32xf32> -> vector<8x32xf32>
      %c0_56 = arith.constant 0 : index
      %c0_57 = arith.constant 0 : index
      %113 = vector.load %arg11[%c0_56, %c0_57] : memref<1x32xf32, #tpu.memory_space<vmem>>, vector<1x32xf32>
      %114 = vector.broadcast %113 : vector<1x32xf32> to vector<8x32xf32>
      %115 = arith.addf %112, %114 : vector<8x32xf32>
      %cst_58 = arith.constant 5.000000e-01 : f32
      %116 = vector.broadcast %cst_58 : f32 to vector<8x32xf32>
      %117 = arith.mulf %116, %115 : vector<8x32xf32>
      %cst_59 = arith.constant 0.707106769 : f32
      %118 = vector.broadcast %cst_59 : f32 to vector<8x32xf32>
      %119 = arith.mulf %115, %118 : vector<8x32xf32>
      %120 = math.absf %119 : vector<8x32xf32>
      %cst_60 = arith.constant 0.327591091 : f32
      %121 = vector.broadcast %cst_60 : f32 to vector<8x32xf32>
      %122 = arith.mulf %121, %120 : vector<8x32xf32>
      %cst_61 = arith.constant 1.000000e+00 : f32
      %123 = vector.broadcast %cst_61 : f32 to vector<8x32xf32>
      %124 = arith.addf %123, %122 : vector<8x32xf32>
      %cst_62 = arith.constant 1.000000e+00 : f32
      %125 = vector.broadcast %cst_62 : f32 to vector<8x32xf32>
      %126 = arith.divf %125, %124 : vector<8x32xf32>
      %cst_63 = arith.constant 1.06140542 : f32
      %127 = vector.broadcast %cst_63 : f32 to vector<8x32xf32>
      %128 = arith.mulf %127, %126 : vector<8x32xf32>
      %cst_64 = arith.constant -1.45315206 : f32
      %129 = vector.broadcast %cst_64 : f32 to vector<8x32xf32>
      %130 = arith.addf %128, %129 : vector<8x32xf32>
      %131 = arith.mulf %130, %126 : vector<8x32xf32>
      %cst_65 = arith.constant 1.42141378 : f32
      %132 = vector.broadcast %cst_65 : f32 to vector<8x32xf32>
      %133 = arith.addf %131, %132 : vector<8x32xf32>
      %134 = arith.mulf %133, %126 : vector<8x32xf32>
      %cst_66 = arith.constant -0.284496725 : f32
      %135 = vector.broadcast %cst_66 : f32 to vector<8x32xf32>
      %136 = arith.addf %134, %135 : vector<8x32xf32>
      %137 = arith.mulf %136, %126 : vector<8x32xf32>
      %cst_67 = arith.constant 0.254829586 : f32
      %138 = vector.broadcast %cst_67 : f32 to vector<8x32xf32>
      %139 = arith.addf %137, %138 : vector<8x32xf32>
      %140 = arith.mulf %139, %126 : vector<8x32xf32>
      %141 = arith.mulf %120, %120 : vector<8x32xf32>
      %cst_68 = arith.constant 0.000000e+00 : f32
      %142 = vector.broadcast %cst_68 : f32 to vector<8x32xf32>
      %143 = arith.subf %142, %141 : vector<8x32xf32>
      %144 = math.exp %143 : vector<8x32xf32>
      %145 = arith.mulf %140, %144 : vector<8x32xf32>
      %cst_69 = arith.constant 1.000000e+00 : f32
      %146 = vector.broadcast %cst_69 : f32 to vector<8x32xf32>
      %147 = arith.subf %146, %145 : vector<8x32xf32>
      %cst_70 = arith.constant 0.000000e+00 : f32
      %148 = vector.broadcast %cst_70 : f32 to vector<8x32xf32>
      %149 = arith.cmpf olt, %119, %148 : vector<8x32xf32>
      %cst_71 = arith.constant 0.000000e+00 : f32
      %150 = vector.broadcast %cst_71 : f32 to vector<8x32xf32>
      %151 = arith.subf %150, %147 : vector<8x32xf32>
      %152 = arith.select %149, %151, %147 : vector<8x32xi1>, vector<8x32xf32>
      %cst_72 = arith.constant 1.000000e+00 : f32
      %153 = vector.broadcast %cst_72 : f32 to vector<8x32xf32>
      %154 = arith.addf %153, %152 : vector<8x32xf32>
      %155 = arith.mulf %117, %154 : vector<8x32xf32>
      %c0_73 = arith.constant 0 : index
      %c0_74 = arith.constant 0 : index
      %156 = vector.load %arg12[%c0_73, %c0_74] : memref<1x32xf32, #tpu.memory_space<vmem>>, vector<1x32xf32>
      %157 = vector.broadcast %156 : vector<1x32xf32> to vector<8x32xf32>
      %158 = arith.mulf %155, %157 : vector<8x32xf32>
      %cst_75 = arith.constant dense<0.000000e+00> : vector<8xf32>
      %159 = vector.multi_reduction <add>, %158, %cst_75 [1] : vector<8x32xf32> to vector<8xf32>
      %160 = vector.shape_cast %159 : vector<8xf32> to vector<8x1xf32>
      %c0_76 = arith.constant 0 : index
      %c0_77 = arith.constant 0 : index
      %161 = vector.load %arg13[%c0_76, %c0_77] : memref<1x1xf32, #tpu.memory_space<vmem>>, vector<1x1xf32>
      %162 = vector.broadcast %161 : vector<1x1xf32> to vector<8x1xf32>
      %163 = arith.addf %160, %162 : vector<8x1xf32>
      %c0_78 = arith.constant 0 : index
      %c0_79 = arith.constant 0 : index
      %164 = vector.load %arg14[%c0_78, %c0_79] : memref<8x1xf32, #tpu.memory_space<vmem>>, vector<8x1xf32>
      tpu.vector_store %arg14[%c0_78, %c0_79], %163 {strides = array<i32>} : memref<8x1xf32, #tpu.memory_space<vmem>>, vector<8x1xf32>,
    } else {
    }
    return
  }
  func.func @transform_0(%arg0: i32, %arg1: i32) -> i32 {
    %c0_i32 = arith.constant 0 : i32
    %c0_i32_0 = arith.constant 0 : i32
    return %c0_i32 : i32
  }
  func.func @transform_1(%arg0: i32, %arg1: i32) -> (i32, i32, i32) {
    %c0_i32 = arith.constant 0 : i32
    %c0_i32_0 = arith.constant 0 : i32
    return %arg0, %arg1, %c0_i32 : i32, i32, i32
  }
  func.func @transform_2(%arg0: i32, %arg1: i32) -> (i32, i32, i32) {
    %c0_i32 = arith.constant 0 : i32
    %c0_i32_0 = arith.constant 0 : i32
    return %arg0, %arg1, %c0_i32 : i32, i32, i32
  }
  func.func @transform_3(%arg0: i32, %arg1: i32) -> (i32, i32, i32) {
    %c0_i32 = arith.constant 0 : i32
    %c0_i32_0 = arith.constant 0 : i32
    return %arg0, %arg1, %c0_i32 : i32, i32, i32
  }
  func.func @transform_4(%arg0: i32, %arg1: i32) -> (i32, i32, i32) {
    %c0_i32 = arith.constant 0 : i32
    %c0_i32_0 = arith.constant 0 : i32
    return %arg0, %arg1, %c0_i32 : i32, i32, i32
  }
  func.func @transform_5(%arg0: i32, %arg1: i32) -> (i32, i32) {
    %c0_i32 = arith.constant 0 : i32
    %c0_i32_0 = arith.constant 0 : i32
    %c0_i32_1 = arith.constant 0 : i32
    return %c0_i32, %c0_i32_0 : i32, i32
  }
  func.func @transform_6(%arg0: i32, %arg1: i32) -> (i32, i32) {
    %c0_i32 = arith.constant 0 : i32
    %c0_i32_0 = arith.constant 0 : i32
    %c0_i32_1 = arith.constant 0 : i32
    return %c0_i32, %c0_i32_0 : i32, i32
  }
  func.func @transform_7(%arg0: i32, %arg1: i32) -> (i32, i32) {
    %c0_i32 = arith.constant 0 : i32
    %c0_i32_0 = arith.constant 0 : i32
    %c0_i32_1 = arith.constant 0 : i32
    return %c0_i32, %c0_i32_0 : i32, i32
  }
  func.func @transform_8(%arg0: i32, %arg1: i32) -> (i32, i32) {
    %c0_i32 = arith.constant 0 : i32
    %c0_i32_0 = arith.constant 0 : i32
    %c0_i32_1 = arith.constant 0 : i32
    return %c0_i32, %c0_i32_0 : i32, i32
  }
  func.func @transform_9(%arg0: i32, %arg1: i32) -> (i32, i32) {
    %c0_i32 = arith.constant 0 : i32
    %c0_i32_0 = arith.constant 0 : i32
    %c0_i32_1 = arith.constant 0 : i32
    return %c0_i32, %c0_i32_0 : i32, i32
  }
  func.func @transform_10(%arg0: i32, %arg1: i32) -> (i32, i32) {
    %c0_i32 = arith.constant 0 : i32
    %c0_i32_0 = arith.constant 0 : i32
    %c0_i32_1 = arith.constant 0 : i32
    return %c0_i32, %c0_i32_0 : i32, i32
  }
  func.func @transform_11(%arg0: i32, %arg1: i32) -> (i32, i32) {
    %c0_i32 = arith.constant 0 : i32
    %c0_i32_0 = arith.constant 0 : i32
    %c0_i32_1 = arith.constant 0 : i32
    return %c0_i32, %c0_i32_0 : i32, i32
  }
  func.func @transform_12(%arg0: i32, %arg1: i32) -> (i32, i32) {
    %c0_i32 = arith.constant 0 : i32
    %c0_i32_0 = arith.constant 0 : i32
    return %arg0, %c0_i32 : i32, i32
  }
}

</mosaic_0001>

<llo_original>
// kernel: prediction_head.1
$region0: #{prediction_head.1}
  #allocation0 [shape = 'u32[]', space=smem, size = 0x4, offset = 0x4, fixed_abs, tag = 'smem constant byte address 0x4 - core index']
  #allocation1 [shape = 'u32[144,128]{1,0:T(1,128)}', space=vmem, size = 0x12000, scoped, tag = 'internal scratch']
  #allocation2 [shape = 'f32[8,128]{1,0:T(8,128)}', space=vmem, size = 0x1000, scoped, tag = 'scratch operand']
  #allocation3 [shape = 'f32[8,128]{1,0:T(8,128)}', space=vmem, size = 0x1000, scoped, tag = 'scratch operand']
  #allocation4 [shape = 'f32[1,1]{1,0:T(1,128)S(1)}', space=vmem, size = 0x200, scoped, tag = 'scoped memory for prediction_head.1']
  %s0 = inlined_call_operand.vmem [shape: f32[4], index: 0, kind: input, shape index: {}]
  %s1 = inlined_call_operand.vmem [shape: bf16[16,32,128], index: 1, kind: input, shape index: {}]
  %s2 = inlined_call_operand.vmem [shape: bf16[16,32,128], index: 2, kind: input, shape index: {}]
  %s3 = inlined_call_operand.vmem [shape: bf16[16,32,128], index: 3, kind: input, shape index: {}]
  %s4 = inlined_call_operand.vmem [shape: bf16[16,32,128], index: 4, kind: input, shape index: {}]
  %s5 = inlined_call_operand.vmem [shape: f32[32,32], index: 5, kind: input, shape index: {}]
  %s6 = inlined_call_operand.vmem [shape: f32[32,32], index: 6, kind: input, shape index: {}]
  %s7 = inlined_call_operand.vmem [shape: f32[1,32], index: 7, kind: input, shape index: {}]
  %s8 = inlined_call_operand.vmem [shape: f32[32,32], index: 8, kind: input, shape index: {}]
  %s9 = inlined_call_operand.vmem [shape: f32[1,32], index: 9, kind: input, shape index: {}]
  %s10 = inlined_call_operand.vmem [shape: f32[1,32], index: 10, kind: input, shape index: {}]
  %s11 = inlined_call_operand.<no memory space> [shape: f32[1,1], index: 11, kind: input, shape index: {}]
  %s12 = inlined_call_operand.vmem [shape: f32[16,1], index: 12, kind: output, shape index: {}]
  %s13 = sld [smem:[#allocation0]]
  $region257: #{prediction_head.1} parent=0
    _
  %s15 = ssub.s32 1, %s13
  %s16 = scalar_select 0, %s15, %s13
  %v17 = vstv %s11
  %18 = vst [vmem:[#allocation4] sm:$0x1] %v17
  $region1: #{prediction_head.1} parent=0
    #allocation5 [shape = 'u8[512]{0}', space=smem, size = 0x200, scoped, tag = 'input window, operand 0, single buffered']
    #allocation6 [shape = 's32[2]{0}', space=sflag, size = 0x8, scoped, tag = 'scoped memory for prediction_head.1']
    #allocation7 [shape = 'u8[65536]{0}', space=vmem, size = 0x10000, scoped, tag = 'input window, operand 1']
    #allocation8 [shape = 'u8[65536]{0}', space=vmem, size = 0x10000, scoped, tag = 'input window, operand 2']
    #allocation9 [shape = 'u8[65536]{0}', space=vmem, size = 0x10000, scoped, tag = 'input window, operand 3']
    #allocation10 [shape = 'u8[65536]{0}', space=vmem, size = 0x10000, scoped, tag = 'input window, operand 4']
    %19 = vsyncpa [#allocation6], 0
    loop: start=0, step=1, limit=6
    $region2: #{prediction_head.1} parent=1 // loop_pre_header
      _
    $region3: #{prediction_head.1} parent=1 // loop_header
      %s21 = sphi 0, %s25
      %p22 = scmp.ge.s32.totalorder %s21, 6
      %s28 = sphi 0, %s40
      %s29 = sphi 0, %s36
      %s30 = sphi 0, %s28
      %s31 = sphi 0, %s29
      %s32 = sphi 0, %s30
      %s33 = sphi 0, %s31
      %s41 = sphi 0, %s41
      %s43 = sphi 0, %s41
      %s44 = sphi 0, %s43
      %s58 = sphi 0, %s44
      %s66 = sphi 0, %s68
      %s69 = sphi 0, %s66
      %s70 = sphi 0, %s69
      %s86 = sphi 0, %s70
      %s94 = sphi 0, %s96
      %s97 = sphi 0, %s94
      %s98 = sphi 0, %s97
      %s114 = sphi 0, %s98
      %s122 = sphi 0, %s124
      %s125 = sphi 0, %s122
      %s126 = sphi 0, %s125
      %s142 = sphi 0, %s126
      %s150 = sphi 0, %s152
      %s153 = sphi 0, %s150
      %s154 = sphi 0, %s153
      %s170 = sphi 0, %s154
      %s174 = sphi 0, %s174
      %s176 = sphi 0, %s174
      %s177 = sphi 0, %s176
      %s191 = sphi 0, %s177
      %s195 = sphi 0, %s195
      %s197 = sphi 0, %s195
      %s198 = sphi 0, %s197
      %s212 = sphi 0, %s198
      %s216 = sphi 0, %s216
      %s218 = sphi 0, %s216
      %s219 = sphi 0, %s218
      %s233 = sphi 0, %s219
      %s237 = sphi 0, %s237
      %s239 = sphi 0, %s237
      %s240 = sphi 0, %s239
      %s254 = sphi 0, %s240
      %s258 = sphi 0, %s258
      %s260 = sphi 0, %s258
      %s261 = sphi 0, %s260
      %s275 = sphi 0, %s261
      %s279 = sphi 0, %s279
      %s281 = sphi 0, %s279
      %s282 = sphi 0, %s281
      %s296 = sphi 0, %s282
      %s300 = sphi 0, %s300
      %s302 = sphi 0, %s300
      %s303 = sphi 0, %s302
      %s317 = sphi 0, %s303
      %s323 = sphi 0, %s325
      %s326 = sphi 0, %s323
      %s327 = sphi 0, %s326
      %s343 = sphi 0, %s327
    $region4: #{prediction_head.1} parent=1 // loop_header_branch
      %24 = sbr.rel (%p22) target = $region8
    $region5: #{prediction_head.1} parent=1 // loop_body
      %s26 = ssub.s32 %s21, 1
      %s27 = ssub.s32 %s21, 2
      %s34 = sadd.s32 1, %s29
      %p35 = scmp.ge.s32.totalorder %s34, 2
      %s36 = scalar_select %p35, 0, %s34
      %s37 = sadd.s32 1, %s28
      %s38 = scalar_select %p35, %s37, %s28
      %p39 = scmp.ge.s32.totalorder %s38, 2
      %s40 = scalar_select %p39, 0, %s38
      %s42 = sadd.s32 %s41, 1
      %p45 = scmp.eq.s32.totalorder %s21, 3
      %p46 = scmp.ne.s32.totalorder %s41, %s43
      %p47 = scmp.eq.s32.totalorder %s21, 0
      %p48 = por %p46, %p47
      %p49 = scmp.ne.s32.totalorder %s41, %s43
      %p50 = scmp.eq.s32.totalorder %s26, 3
      %p51 = por %p49, %p50
      %p52 = scmp.ne.s32.totalorder %s43, %s44
      %p53 = scmp.eq.s32.totalorder %s26, 0
      %p54 = por %p52, %p53
      %p55 = scmp.ne.s32.totalorder %s43, %s44
      %p56 = scmp.eq.s32.totalorder %s27, 3
      %p57 = por %p55, %p56
      %p59 = scmp.ne.s32.totalorder %s44, %s58
      %p60 = scmp.eq.s32.totalorder %s27, 0
      %p61 = por %p59, %p60
      %s62 = ssub.s32 %s28, %s40
      %s63 = ssub.s32 %s29, %s36
      %s64 = sor.u32 %s62, %s63
      %p65 = scmp.eq.s32.totalorder %s64, 0
      %s67 = sadd.s32 %s66, 1
      %s68 = scalar_select %p65, %s66, %s67
      %p71 = pneg %p65
      %p72 = scmp.eq.s32.totalorder %s21, 3
      %p73 = por %p71, %p72
      %p74 = scmp.ne.s32.totalorder %s66, %s69
      %p75 = scmp.eq.s32.totalorder %s21, 0
      %p76 = por %p74, %p75
      %p77 = scmp.ne.s32.totalorder %s66, %s69
      %p78 = scmp.eq.s32.totalorder %s26, 3
      %p79 = por %p77, %p78
      %p80 = scmp.ne.s32.totalorder %s69, %s70
      %p81 = scmp.eq.s32.totalorder %s26, 0
      %p82 = por %p80, %p81
      %p83 = scmp.ne.s32.totalorder %s69, %s70
      %p84 = scmp.eq.s32.totalorder %s27, 3
      %p85 = por %p83, %p84
      %p87 = scmp.ne.s32.totalorder %s70, %s86
      %p88 = scmp.eq.s32.totalorder %s27, 0
      %p89 = por %p87, %p88
      %s90 = ssub.s32 %s28, %s40
      %s91 = ssub.s32 %s29, %s36
      %s92 = sor.u32 %s90, %s91
      %p93 = scmp.eq.s32.totalorder %s92, 0
      %s95 = sadd.s32 %s94, 1
      %s96 = scalar_select %p93, %s94, %s95
      %p99 = pneg %p93
      %p100 = scmp.eq.s32.totalorder %s21, 3
      %p101 = por %p99, %p100
      %p102 = scmp.ne.s32.totalorder %s94, %s97
      %p103 = scmp.eq.s32.totalorder %s21, 0
      %p104 = por %p102, %p103
      %p105 = scmp.ne.s32.totalorder %s94, %s97
      %p106 = scmp.eq.s32.totalorder %s26, 3
      %p107 = por %p105, %p106
      %p108 = scmp.ne.s32.totalorder %s97, %s98
      %p109 = scmp.eq.s32.totalorder %s26, 0
      %p110 = por %p108, %p109
      %p111 = scmp.ne.s32.totalorder %s97, %s98
      %p112 = scmp.eq.s32.totalorder %s27, 3
      %p113 = por %p111, %p112
      %p115 = scmp.ne.s32.totalorder %s98, %s114
      %p116 = scmp.eq.s32.totalorder %s27, 0
      %p117 = por %p115, %p116
      %s118 = ssub.s32 %s28, %s40
      %s119 = ssub.s32 %s29, %s36
      %s120 = sor.u32 %s118, %s119
      %p121 = scmp.eq.s32.totalorder %s120, 0
      %s123 = sadd.s32 %s122, 1
      %s124 = scalar_select %p121, %s122, %s123
      %p127 = pneg %p121
      %p128 = scmp.eq.s32.totalorder %s21, 3
      %p129 = por %p127, %p128
      %p130 = scmp.ne.s32.totalorder %s122, %s125
      %p131 = scmp.eq.s32.totalorder %s21, 0
      %p132 = por %p130, %p131
      %p133 = scmp.ne.s32.totalorder %s122, %s125
      %p134 = scmp.eq.s32.totalorder %s26, 3
      %p135 = por %p133, %p134
      %p136 = scmp.ne.s32.totalorder %s125, %s126
      %p137 = scmp.eq.s32.totalorder %s26, 0
      %p138 = por %p136, %p137
      %p139 = scmp.ne.s32.totalorder %s125, %s126
      %p140 = scmp.eq.s32.totalorder %s27, 3
      %p141 = por %p139, %p140
      %p143 = scmp.ne.s32.totalorder %s126, %s142
      %p144 = scmp.eq.s32.totalorder %s27, 0
      %p145 = por %p143, %p144
      %s146 = ssub.s32 %s28, %s40
      %s147 = ssub.s32 %s29, %s36
      %s148 = sor.u32 %s146, %s147
      %p149 = scmp.eq.s32.totalorder %s148, 0
      %s151 = sadd.s32 %s150, 1
      %s152 = scalar_select %p149, %s150, %s151
      %p155 = pneg %p149
      %p156 = scmp.eq.s32.totalorder %s21, 3
      %p157 = por %p155, %p156
      %p158 = scmp.ne.s32.totalorder %s150, %s153
      %p159 = scmp.eq.s32.totalorder %s21, 0
      %p160 = por %p158, %p159
      %p161 = scmp.ne.s32.totalorder %s150, %s153
      %p162 = scmp.eq.s32.totalorder %s26, 3
      %p163 = por %p161, %p162
      %p164 = scmp.ne.s32.totalorder %s153, %s154
      %p165 = scmp.eq.s32.totalorder %s26, 0
      %p166 = por %p164, %p165
      %p167 = scmp.ne.s32.totalorder %s153, %s154
      %p168 = scmp.eq.s32.totalorder %s27, 3
      %p169 = por %p167, %p168
      %p171 = scmp.ne.s32.totalorder %s154, %s170
      %p172 = scmp.eq.s32.totalorder %s27, 0
      %p173 = por %p171, %p172
      %s175 = sadd.s32 %s174, 1
      %p178 = scmp.eq.s32.totalorder %s21, 3
      %p179 = scmp.ne.s32.totalorder %s174, %s176
      %p180 = scmp.eq.s32.totalorder %s21, 0
      %p181 = por %p179, %p180
      %p182 = scmp.ne.s32.totalorder %s174, %s176
      %p183 = scmp.eq.s32.totalorder %s26, 3
      %p184 = por %p182, %p183
      %p185 = scmp.ne.s32.totalorder %s176, %s177
      %p186 = scmp.eq.s32.totalorder %s26, 0
      %p187 = por %p185, %p186
      %p188 = scmp.ne.s32.totalorder %s176, %s177
      %p189 = scmp.eq.s32.totalorder %s27, 3
      %p190 = por %p188, %p189
      %p192 = scmp.ne.s32.totalorder %s177, %s191
      %p193 = scmp.eq.s32.totalorder %s27, 0
      %p194 = por %p192, %p193
      %s196 = sadd.s32 %s195, 1
      %p199 = scmp.eq.s32.totalorder %s21, 3
      %p200 = scmp.ne.s32.totalorder %s195, %s197
      %p201 = scmp.eq.s32.totalorder %s21, 0
      %p202 = por %p200, %p201
      %p203 = scmp.ne.s32.totalorder %s195, %s197
      %p204 = scmp.eq.s32.totalorder %s26, 3
      %p205 = por %p203, %p204
      %p206 = scmp.ne.s32.totalorder %s197, %s198
      %p207 = scmp.eq.s32.totalorder %s26, 0
      %p208 = por %p206, %p207
      %p209 = scmp.ne.s32.totalorder %s197, %s198
      %p210 = scmp.eq.s32.totalorder %s27, 3
      %p211 = por %p209, %p210
      %p213 = scmp.ne.s32.totalorder %s198, %s212
      %p214 = scmp.eq.s32.totalorder %s27, 0
      %p215 = por %p213, %p214
      %s217 = sadd.s32 %s216, 1
      %p220 = scmp.eq.s32.totalorder %s21, 3
      %p221 = scmp.ne.s32.totalorder %s216, %s218
      %p222 = scmp.eq.s32.totalorder %s21, 0
      %p223 = por %p221, %p222
      %p224 = scmp.ne.s32.totalorder %s216, %s218
      %p225 = scmp.eq.s32.totalorder %s26, 3
      %p226 = por %p224, %p225
      %p227 = scmp.ne.s32.totalorder %s218, %s219
      %p228 = scmp.eq.s32.totalorder %s26, 0
      %p229 = por %p227, %p228
      %p230 = scmp.ne.s32.totalorder %s218, %s219
      %p231 = scmp.eq.s32.totalorder %s27, 3
      %p232 = por %p230, %p231
      %p234 = scmp.ne.s32.totalorder %s219, %s233
      %p235 = scmp.eq.s32.totalorder %s27, 0
      %p236 = por %p234, %p235
      %s238 = sadd.s32 %s237, 1
      %p241 = scmp.eq.s32.totalorder %s21, 3
      %p242 = scmp.ne.s32.totalorder %s237, %s239
      %p243 = scmp.eq.s32.totalorder %s21, 0
      %p244 = por %p242, %p243
      %p245 = scmp.ne.s32.totalorder %s237, %s239
      %p246 = scmp.eq.s32.totalorder %s26, 3
      %p247 = por %p245, %p246
      %p248 = scmp.ne.s32.totalorder %s239, %s240
      %p249 = scmp.eq.s32.totalorder %s26, 0
      %p250 = por %p248, %p249
      %p251 = scmp.ne.s32.totalorder %s239, %s240
      %p252 = scmp.eq.s32.totalorder %s27, 3
      %p253 = por %p251, %p252
      %p255 = scmp.ne.s32.totalorder %s240, %s254
      %p256 = scmp.eq.s32.totalorder %s27, 0
      %p257 = por %p255, %p256
      %s259 = sadd.s32 %s258, 1
      %p262 = scmp.eq.s32.totalorder %s21, 3
      %p263 = scmp.ne.s32.totalorder %s258, %s260
      %p264 = scmp.eq.s32.totalorder %s21, 0
      %p265 = por %p263, %p264
      %p266 = scmp.ne.s32.totalorder %s258, %s260
      %p267 = scmp.eq.s32.totalorder %s26, 3
      %p268 = por %p266, %p267
      %p269 = scmp.ne.s32.totalorder %s260, %s261
      %p270 = scmp.eq.s32.totalorder %s26, 0
      %p271 = por %p269, %p270
      %p272 = scmp.ne.s32.totalorder %s260, %s261
      %p273 = scmp.eq.s32.totalorder %s27, 3
      %p274 = por %p272, %p273
      %p276 = scmp.ne.s32.totalorder %s261, %s275
      %p277 = scmp.eq.s32.totalorder %s27, 0
      %p278 = por %p276, %p277
      %s280 = sadd.s32 %s279, 1
      %p283 = scmp.eq.s32.totalorder %s21, 3
      %p284 = scmp.ne.s32.totalorder %s279, %s281
      %p285 = scmp.eq.s32.totalorder %s21, 0
      %p286 = por %p284, %p285
      %p287 = scmp.ne.s32.totalorder %s279, %s281
      %p288 = scmp.eq.s32.totalorder %s26, 3
      %p289 = por %p287, %p288
      %p290 = scmp.ne.s32.totalorder %s281, %s282
      %p291 = scmp.eq.s32.totalorder %s26, 0
      %p292 = por %p290, %p291
      %p293 = scmp.ne.s32.totalorder %s281, %s282
      %p294 = scmp.eq.s32.totalorder %s27, 3
      %p295 = por %p293, %p294
      %p297 = scmp.ne.s32.totalorder %s282, %s296
      %p298 = scmp.eq.s32.totalorder %s27, 0
      %p299 = por %p297, %p298
      %s301 = sadd.s32 %s300, 1
      %p304 = scmp.eq.s32.totalorder %s21, 3
      %p305 = scmp.ne.s32.totalorder %s300, %s302
      %p306 = scmp.eq.s32.totalorder %s21, 0
      %p307 = por %p305, %p306
      %p308 = scmp.ne.s32.totalorder %s300, %s302
      %p309 = scmp.eq.s32.totalorder %s26, 3
      %p310 = por %p308, %p309
      %p311 = scmp.ne.s32.totalorder %s302, %s303
      %p312 = scmp.eq.s32.totalorder %s26, 0
      %p313 = por %p311, %p312
      %p314 = scmp.ne.s32.totalorder %s302, %s303
      %p315 = scmp.eq.s32.totalorder %s27, 3
      %p316 = por %p314, %p315
      %p318 = scmp.ne.s32.totalorder %s303, %s317
      %p319 = scmp.eq.s32.totalorder %s27, 0
      %p320 = por %p318, %p319
      %s321 = ssub.s32 %s28, %s40
      %p322 = scmp.eq.s32.totalorder %s321, 0
      %s324 = sadd.s32 %s323, 1
      %s325 = scalar_select %p322, %s323, %s324
      %p328 = pneg %p322
      %p329 = scmp.eq.s32.totalorder %s21, 3
      %p330 = por %p328, %p329
      %p331 = scmp.ne.s32.totalorder %s323, %s326
      %p332 = scmp.eq.s32.totalorder %s21, 0
      %p333 = por %p331, %p332
      %p334 = scmp.ne.s32.totalorder %s323, %s326
      %p335 = scmp.eq.s32.totalorder %s26, 3
      %p336 = por %p334, %p335
      %p337 = scmp.ne.s32.totalorder %s326, %s327
      %p338 = scmp.eq.s32.totalorder %s26, 0
      %p339 = por %p337, %p338
      %p340 = scmp.ne.s32.totalorder %s326, %s327
      %p341 = scmp.eq.s32.totalorder %s27, 3
      %p342 = por %p340, %p341
      %p344 = scmp.ne.s32.totalorder %s327, %s343
      %p345 = scmp.eq.s32.totalorder %s27, 0
      %p346 = por %p344, %p345
      %p347 = scmp.le.s32.totalorder 1, %s21
      %p348 = scmp.lt.s32.totalorder %s21, 5
      %p349 = pnand %p347, %p348
      %p350 = pneg %p349
      // Predicated region
      $region9: #{prediction_head.1} parent=5 // pred_check
        _
      $region10: #{prediction_head.1} parent=5 // pred_check_branch
        %352 = sbr.rel (%p349) target = $region12
      $region11: #{prediction_head.1} parent=5 // pred_region
        %s353 = ssub.s32 %s21, 1
        // Predicated region
        $region13: #{prediction_head.1} parent=11 // pred_check
          %p354 = pneg %p54
        $region14: #{prediction_head.1} parent=11 // pred_check_branch
          %356 = sbr.rel (%p354) target = $region16
        $region15: #{prediction_head.1} parent=11 // pred_region
          %s358 = ssub.s32 16, 16
          %359 = vsyncadd [#allocation6], %s358
          %s361 = sshll.u32 %s0, 4
          %s362 = int_to_ptr.vmem [resolvable:$true] %s361
          %364 = dma.vmem_to_smem %s362, 16, [#allocation5], [#allocation6]
        $region16: #{prediction_head.1} parent=11 // pred_fallthru
          _
        // Predicated region
        $region17: #{prediction_head.1} parent=11 // pred_check
          %p365 = pneg %p187
        $region18: #{prediction_head.1} parent=11 // pred_check_branch
          %367 = sbr.rel (%p365) target = $region20
        $region19: #{prediction_head.1} parent=11 // pred_region
          _
        $region20: #{prediction_head.1} parent=11 // pred_fallthru
          _
        // Predicated region
        $region21: #{prediction_head.1} parent=11 // pred_check
          %p368 = pneg %p208
        $region22: #{prediction_head.1} parent=11 // pred_check_branch
          %370 = sbr.rel (%p368) target = $region24
        $region23: #{prediction_head.1} parent=11 // pred_region
          _
        $region24: #{prediction_head.1} parent=11 // pred_fallthru
          _
        // Predicated region
        $region25: #{prediction_head.1} parent=11 // pred_check
          %p371 = pneg %p229
        $region26: #{prediction_head.1} parent=11 // pred_check_branch
          %373 = sbr.rel (%p371) target = $region28
        $region27: #{prediction_head.1} parent=11 // pred_region
          _
        $region28: #{prediction_head.1} parent=11 // pred_fallthru
          _
        // Predicated region
        $region29: #{prediction_head.1} parent=11 // pred_check
          %p374 = pneg %p250
        $region30: #{prediction_head.1} parent=11 // pred_check_branch
          %376 = sbr.rel (%p374) target = $region32
        $region31: #{prediction_head.1} parent=11 // pred_region
          _
        $region32: #{prediction_head.1} parent=11 // pred_fallthru
          _
        // Predicated region
        $region33: #{prediction_head.1} parent=11 // pred_check
          %p377 = pneg %p271
        $region34: #{prediction_head.1} parent=11 // pred_check_branch
          %379 = sbr.rel (%p377) target = $region36
        $region35: #{prediction_head.1} parent=11 // pred_region
          _
        $region36: #{prediction_head.1} parent=11 // pred_fallthru
          _
        // Predicated region
        $region37: #{prediction_head.1} parent=11 // pred_check
          %p380 = pneg %p292
        $region38: #{prediction_head.1} parent=11 // pred_check_branch
          %382 = sbr.rel (%p380) target = $region40
        $region39: #{prediction_head.1} parent=11 // pred_region
          _
        $region40: #{prediction_head.1} parent=11 // pred_fallthru
          _
        // Predicated region
        $region41: #{prediction_head.1} parent=11 // pred_check
          %p383 = pneg %p313
        $region42: #{prediction_head.1} parent=11 // pred_check_branch
          %385 = sbr.rel (%p383) target = $region44
        $region43: #{prediction_head.1} parent=11 // pred_region
          _
        $region44: #{prediction_head.1} parent=11 // pred_fallthru
          _
      $region12: #{prediction_head.1} parent=5 // pred_fallthru
        _
      %p386 = scmp.lt.s32.totalorder %s21, 4
      // Predicated region
      $region45: #{prediction_head.1} parent=5 // pred_check
        %p387 = pneg %p386
      $region46: #{prediction_head.1} parent=5 // pred_check_branch
        %389 = sbr.rel (%p387) target = $region48
      $region47: #{prediction_head.1} parent=5 // pred_region
        // Predicated region
        $region49: #{prediction_head.1} parent=47 // pred_check
          %p390 = pneg %p76
        $region50: #{prediction_head.1} parent=47 // pred_check_branch
          %392 = sbr.rel (%p390) target = $region52
        $region51: #{prediction_head.1} parent=47 // pred_region
          %s393 = sand.u32 %s66, 1
          %s394 = sand.u32 %s66, 1
          %s395 = smul.addr %s394, 64
          %s396 = scalar_lea.vmem [#allocation7], %s395
          %s397 = smul.u32 8, %s28
          %s398 = smul.u32 2, %s29
          %s399 = smul.addr %s397, 4
          %s400 = sadd.s32 %s398, %s399
          %s401 = smul.addr %s400, 4
          %s402 = scalar_lea.vmem %s1, %s401
          // Predicated region
          $region53: #{prediction_head.1} parent=51 // pred_check
            _
          $region54: #{prediction_head.1} parent=51 // pred_check_branch
            %404 = sbr.rel (0) target = $region56
          $region55: #{prediction_head.1} parent=51 // pred_region
            // Predicated region
            $region57: #{prediction_head.1} parent=55 // pred_check
              _
            $region58: #{prediction_head.1} parent=55 // pred_check_branch
              %406 = sbr.rel target = $region60
            $region59: #{prediction_head.1} parent=55 // pred_region
              // Predicated region
              $region72: #{prediction_head.1} parent=59 // pred_check
                _
              $region73: #{prediction_head.1} parent=59 // pred_check_branch
                %451 = sbr.rel (0) target = $region75
              $region74: #{prediction_head.1} parent=59 // pred_region
                loop: start=0, step=1, limit=1
                $region76: #{prediction_head.1} parent=74 // loop_pre_header
                  _
                $region77: #{prediction_head.1} parent=74 // loop_header
                  %s453 = sphi 0, %s457
                  %p454 = scmp.ge.s32.totalorder %s453, 1
                  %s458 = sphi %s402, %s402
                  %s459 = sphi %s396, %s396
                $region78: #{prediction_head.1} parent=74 // loop_header_branch
                  %456 = sbr.rel (%p454) target = $region82
                $region79: #{prediction_head.1} parent=74 // loop_body
                  _
                $region80: #{prediction_head.1} parent=74 // loop_footer
                  %s457 = sadd.s32 1, %s453
                $region81: #{prediction_head.1} parent=74 // loop_footer_branch
                  %452 = sbr.rel target = $region77
                $region82: #{prediction_head.1} parent=74 // loop_exit
                  _
                loop: start=0, step=1, limit=1
                $region83: #{prediction_head.1} parent=74 // loop_pre_header
                  _
                $region84: #{prediction_head.1} parent=74 // loop_header
                  %s462 = sphi 0, %s466
                  %p463 = scmp.ge.s32.totalorder %s462, 1
                  %s467 = sphi %s402, %s402
                  %s468 = sphi %s396, %s396
                $region85: #{prediction_head.1} parent=74 // loop_header_branch
                  %465 = sbr.rel (%p463) target = $region89
                $region86: #{prediction_head.1} parent=74 // loop_body
                  %v469 = vld [vmem:[%s467] sm:$0xf]
                  %470 = vst [vmem:[%s468] sm:$0xf] %v469
                  %v471 = vld [vmem:[%s467 + $0x4] sm:$0xf]
                  %472 = vst [vmem:[%s468 + $0x4] sm:$0xf] %v471
                  %v473 = vld [vmem:[%s467 + $0x10] sm:$0xf]
                  %474 = vst [vmem:[%s468 + $0x8] sm:$0xf] %v473
                  %v475 = vld [vmem:[%s467 + $0x14] sm:$0xf]
                  %476 = vst [vmem:[%s468 + $0xc] sm:$0xf] %v475
                  %v477 = vld [vmem:[%s467 + $0x20] sm:$0xf]
                  %478 = vst [vmem:[%s468 + $0x10] sm:$0xf] %v477
                  %v479 = vld [vmem:[%s467 + $0x24] sm:$0xf]
                  %480 = vst [vmem:[%s468 + $0x14] sm:$0xf] %v479
                  %v481 = vld [vmem:[%s467 + $0x30] sm:$0xf]
                  %482 = vst [vmem:[%s468 + $0x18] sm:$0xf] %v481
                  %v483 = vld [vmem:[%s467 + $0x34] sm:$0xf]
                  %484 = vst [vmem:[%s468 + $0x1c] sm:$0xf] %v483
                  %v485 = vld [vmem:[%s467 + $0x40] sm:$0xf]
                  %486 = vst [vmem:[%s468 + $0x20] sm:$0xf] %v485
                  %v487 = vld [vmem:[%s467 + $0x44] sm:$0xf]
                  %488 = vst [vmem:[%s468 + $0x24] sm:$0xf] %v487
                  %v489 = vld [vmem:[%s467 + $0x50] sm:$0xf]
                  %490 = vst [vmem:[%s468 + $0x28] sm:$0xf] %v489
                  %v491 = vld [vmem:[%s467 + $0x54] sm:$0xf]
                  %492 = vst [vmem:[%s468 + $0x2c] sm:$0xf] %v491
                  %v493 = vld [vmem:[%s467 + $0x60] sm:$0xf]
                  %494 = vst [vmem:[%s468 + $0x30] sm:$0xf] %v493
                  %v495 = vld [vmem:[%s467 + $0x64] sm:$0xf]
                  %496 = vst [vmem:[%s468 + $0x34] sm:$0xf] %v495
                  %v497 = vld [vmem:[%s467 + $0x70] sm:$0xf]
                  %498 = vst [vmem:[%s468 + $0x38] sm:$0xf] %v497
                  %v499 = vld [vmem:[%s467 + $0x74] sm:$0xf]
                  %500 = vst [vmem:[%s468 + $0x3c] sm:$0xf] %v499
                $region87: #{prediction_head.1} parent=74 // loop_footer
                  %s466 = sadd.s32 1, %s462
                $region88: #{prediction_head.1} parent=74 // loop_footer_branch
                  %461 = sbr.rel target = $region84
                $region89: #{prediction_head.1} parent=74 // loop_exit
                  _
              $region75: #{prediction_head.1} parent=59 // pred_fallthru
                _
            $region60: #{prediction_head.1} parent=55 // pred_fallthru
              _
            // Predicated region
            $region61: #{prediction_head.1} parent=55 // pred_check
              _
            $region62: #{prediction_head.1} parent=55 // pred_check_branch
              %408 = sbr.rel (0) target = $region64
            $region63: #{prediction_head.1} parent=55 // pred_region
              loop: start=0, step=1, limit=1
              $region65: #{prediction_head.1} parent=63 // loop_pre_header
                _
              $region66: #{prediction_head.1} parent=63 // loop_header
                %s411 = sphi 0, %s415
                %p412 = scmp.ge.s32.totalorder %s411, 1
                %s416 = sphi %s402, %s402
                %s417 = sphi %s396, %s396
              $region67: #{prediction_head.1} parent=63 // loop_header_branch
                %414 = sbr.rel (%p412) target = $region71
              $region68: #{prediction_head.1} parent=63 // loop_body
                %v418 = vld [vmem:[%s416] sm:$0xf]
                %419 = vst [vmem:[%s417] sm:$0xf] %v418
                %v420 = vld [vmem:[%s416 + $0x4] sm:$0xf]
                %421 = vst [vmem:[%s417 + $0x4] sm:$0xf] %v420
                %v422 = vld [vmem:[%s416 + $0x10] sm:$0xf]
                %423 = vst [vmem:[%s417 + $0x8] sm:$0xf] %v422
                %v424 = vld [vmem:[%s416 + $0x14] sm:$0xf]
                %425 = vst [vmem:[%s417 + $0xc] sm:$0xf] %v424
                %v426 = vld [vmem:[%s416 + $0x20] sm:$0xf]
                %427 = vst [vmem:[%s417 + $0x10] sm:$0xf] %v426
                %v428 = vld [vmem:[%s416 + $0x24] sm:$0xf]
                %429 = vst [vmem:[%s417 + $0x14] sm:$0xf] %v428
                %v430 = vld [vmem:[%s416 + $0x30] sm:$0xf]
                %431 = vst [vmem:[%s417 + $0x18] sm:$0xf] %v430
                %v432 = vld [vmem:[%s416 + $0x34] sm:$0xf]
                %433 = vst [vmem:[%s417 + $0x1c] sm:$0xf] %v432
                %v434 = vld [vmem:[%s416 + $0x40] sm:$0xf]
                %435 = vst [vmem:[%s417 + $0x20] sm:$0xf] %v434
                %v436 = vld [vmem:[%s416 + $0x44] sm:$0xf]
                %437 = vst [vmem:[%s417 + $0x24] sm:$0xf] %v436
                %v438 = vld [vmem:[%s416 + $0x50] sm:$0xf]
                %439 = vst [vmem:[%s417 + $0x28] sm:$0xf] %v438
                %v440 = vld [vmem:[%s416 + $0x54] sm:$0xf]
                %441 = vst [vmem:[%s417 + $0x2c] sm:$0xf] %v440
                %v442 = vld [vmem:[%s416 + $0x60] sm:$0xf]
                %443 = vst [vmem:[%s417 + $0x30] sm:$0xf] %v442
                %v444 = vld [vmem:[%s416 + $0x64] sm:$0xf]
                %445 = vst [vmem:[%s417 + $0x34] sm:$0xf] %v444
                %v446 = vld [vmem:[%s416 + $0x70] sm:$0xf]
                %447 = vst [vmem:[%s417 + $0x38] sm:$0xf] %v446
                %v448 = vld [vmem:[%s416 + $0x74] sm:$0xf]
                %449 = vst [vmem:[%s417 + $0x3c] sm:$0xf] %v448
              $region69: #{prediction_head.1} parent=63 // loop_footer
                %s415 = sadd.s32 1, %s411
              $region70: #{prediction_head.1} parent=63 // loop_footer_branch
                %410 = sbr.rel target = $region66
              $region71: #{prediction_head.1} parent=63 // loop_exit
                _
            $region64: #{prediction_head.1} parent=55 // pred_fallthru
              _
          $region56: #{prediction_head.1} parent=51 // pred_fallthru
            _
          %501 = vnop
        $region52: #{prediction_head.1} parent=47 // pred_fallthru
          _
        // Predicated region
        $region90: #{prediction_head.1} parent=47 // pred_check
          %p502 = pneg %p104
        $region91: #{prediction_head.1} parent=47 // pred_check_branch
          %504 = sbr.rel (%p502) target = $region93
        $region92: #{prediction_head.1} parent=47 // pred_region
          %s505 = sand.u32 %s94, 1
          %s506 = sand.u32 %s94, 1
          %s507 = smul.addr %s506, 64
          %s508 = scalar_lea.vmem [#allocation8], %s507
          %s509 = smul.u32 8, %s28
          %s510 = smul.u32 2, %s29
          %s511 = smul.addr %s509, 4
          %s512 = sadd.s32 %s510, %s511
          %s513 = smul.addr %s512, 4
          %s514 = scalar_lea.vmem %s2, %s513
          // Predicated region
          $region94: #{prediction_head.1} parent=92 // pred_check
            _
          $region95: #{prediction_head.1} parent=92 // pred_check_branch
            %516 = sbr.rel (0) target = $region97
          $region96: #{prediction_head.1} parent=92 // pred_region
            // Predicated region
            $region98: #{prediction_head.1} parent=96 // pred_check
              _
            $region99: #{prediction_head.1} parent=96 // pred_check_branch
              %518 = sbr.rel target = $region101
            $region100: #{prediction_head.1} parent=96 // pred_region
              // Predicated region
              $region113: #{prediction_head.1} parent=100 // pred_check
                _
              $region114: #{prediction_head.1} parent=100 // pred_check_branch
                %563 = sbr.rel (0) target = $region116
              $region115: #{prediction_head.1} parent=100 // pred_region
                loop: start=0, step=1, limit=1
                $region117: #{prediction_head.1} parent=115 // loop_pre_header
                  _
                $region118: #{prediction_head.1} parent=115 // loop_header
                  %s565 = sphi 0, %s569
                  %p566 = scmp.ge.s32.totalorder %s565, 1
                  %s570 = sphi %s514, %s514
                  %s571 = sphi %s508, %s508
                $region119: #{prediction_head.1} parent=115 // loop_header_branch
                  %568 = sbr.rel (%p566) target = $region123
                $region120: #{prediction_head.1} parent=115 // loop_body
                  _
                $region121: #{prediction_head.1} parent=115 // loop_footer
                  %s569 = sadd.s32 1, %s565
                $region122: #{prediction_head.1} parent=115 // loop_footer_branch
                  %564 = sbr.rel target = $region118
                $region123: #{prediction_head.1} parent=115 // loop_exit
                  _
                loop: start=0, step=1, limit=1
                $region124: #{prediction_head.1} parent=115 // loop_pre_header
                  _
                $region125: #{prediction_head.1} parent=115 // loop_header
                  %s574 = sphi 0, %s578
                  %p575 = scmp.ge.s32.totalorder %s574, 1
                  %s579 = sphi %s514, %s514
                  %s580 = sphi %s508, %s508
                $region126: #{prediction_head.1} parent=115 // loop_header_branch
                  %577 = sbr.rel (%p575) target = $region130
                $region127: #{prediction_head.1} parent=115 // loop_body
                  %v581 = vld [vmem:[%s579] sm:$0xf]
                  %582 = vst [vmem:[%s580] sm:$0xf] %v581
                  %v583 = vld [vmem:[%s579 + $0x4] sm:$0xf]
                  %584 = vst [vmem:[%s580 + $0x4] sm:$0xf] %v583
                  %v585 = vld [vmem:[%s579 + $0x10] sm:$0xf]
                  %586 = vst [vmem:[%s580 + $0x8] sm:$0xf] %v585
                  %v587 = vld [vmem:[%s579 + $0x14] sm:$0xf]
                  %588 = vst [vmem:[%s580 + $0xc] sm:$0xf] %v587
                  %v589 = vld [vmem:[%s579 + $0x20] sm:$0xf]
                  %590 = vst [vmem:[%s580 + $0x10] sm:$0xf] %v589
                  %v591 = vld [vmem:[%s579 + $0x24] sm:$0xf]
                  %592 = vst [vmem:[%s580 + $0x14] sm:$0xf] %v591
                  %v593 = vld [vmem:[%s579 + $0x30] sm:$0xf]
                  %594 = vst [vmem:[%s580 + $0x18] sm:$0xf] %v593
                  %v595 = vld [vmem:[%s579 + $0x34] sm:$0xf]
                  %596 = vst [vmem:[%s580 + $0x1c] sm:$0xf] %v595
                  %v597 = vld [vmem:[%s579 + $0x40] sm:$0xf]
                  %598 = vst [vmem:[%s580 + $0x20] sm:$0xf] %v597
                  %v599 = vld [vmem:[%s579 + $0x44] sm:$0xf]
                  %600 = vst [vmem:[%s580 + $0x24] sm:$0xf] %v599
                  %v601 = vld [vmem:[%s579 + $0x50] sm:$0xf]
                  %602 = vst [vmem:[%s580 + $0x28] sm:$0xf] %v601
                  %v603 = vld [vmem:[%s579 + $0x54] sm:$0xf]
                  %604 = vst [vmem:[%s580 + $0x2c] sm:$0xf] %v603
                  %v605 = vld [vmem:[%s579 + $0x60] sm:$0xf]
                  %606 = vst [vmem:[%s580 + $0x30] sm:$0xf] %v605
                  %v607 = vld [vmem:[%s579 + $0x64] sm:$0xf]
                  %608 = vst [vmem:[%s580 + $0x34] sm:$0xf] %v607
                  %v609 = vld [vmem:[%s579 + $0x70] sm:$0xf]
                  %610 = vst [vmem:[%s580 + $0x38] sm:$0xf] %v609
                  %v611 = vld [vmem:[%s579 + $0x74] sm:$0xf]
                  %612 = vst [vmem:[%s580 + $0x3c] sm:$0xf] %v611
                $region128: #{prediction_head.1} parent=115 // loop_footer
                  %s578 = sadd.s32 1, %s574
                $region129: #{prediction_head.1} parent=115 // loop_footer_branch
                  %573 = sbr.rel target = $region125
                $region130: #{prediction_head.1} parent=115 // loop_exit
                  _
              $region116: #{prediction_head.1} parent=100 // pred_fallthru
                _
            $region101: #{prediction_head.1} parent=96 // pred_fallthru
              _
            // Predicated region
            $region102: #{prediction_head.1} parent=96 // pred_check
              _
            $region103: #{prediction_head.1} parent=96 // pred_check_branch
              %520 = sbr.rel (0) target = $region105
            $region104: #{prediction_head.1} parent=96 // pred_region
              loop: start=0, step=1, limit=1
              $region106: #{prediction_head.1} parent=104 // loop_pre_header
                _
              $region107: #{prediction_head.1} parent=104 // loop_header
                %s523 = sphi 0, %s527
                %p524 = scmp.ge.s32.totalorder %s523, 1
                %s528 = sphi %s514, %s514
                %s529 = sphi %s508, %s508
              $region108: #{prediction_head.1} parent=104 // loop_header_branch
                %526 = sbr.rel (%p524) target = $region112
              $region109: #{prediction_head.1} parent=104 // loop_body
                %v530 = vld [vmem:[%s528] sm:$0xf]
                %531 = vst [vmem:[%s529] sm:$0xf] %v530
                %v532 = vld [vmem:[%s528 + $0x4] sm:$0xf]
                %533 = vst [vmem:[%s529 + $0x4] sm:$0xf] %v532
                %v534 = vld [vmem:[%s528 + $0x10] sm:$0xf]
                %535 = vst [vmem:[%s529 + $0x8] sm:$0xf] %v534
                %v536 = vld [vmem:[%s528 + $0x14] sm:$0xf]
                %537 = vst [vmem:[%s529 + $0xc] sm:$0xf] %v536
                %v538 = vld [vmem:[%s528 + $0x20] sm:$0xf]
                %539 = vst [vmem:[%s529 + $0x10] sm:$0xf] %v538
                %v540 = vld [vmem:[%s528 + $0x24] sm:$0xf]
                %541 = vst [vmem:[%s529 + $0x14] sm:$0xf] %v540
                %v542 = vld [vmem:[%s528 + $0x30] sm:$0xf]
                %543 = vst [vmem:[%s529 + $0x18] sm:$0xf] %v542
                %v544 = vld [vmem:[%s528 + $0x34] sm:$0xf]
                %545 = vst [vmem:[%s529 + $0x1c] sm:$0xf] %v544
                %v546 = vld [vmem:[%s528 + $0x40] sm:$0xf]
                %547 = vst [vmem:[%s529 + $0x20] sm:$0xf] %v546
                %v548 = vld [vmem:[%s528 + $0x44] sm:$0xf]
                %549 = vst [vmem:[%s529 + $0x24] sm:$0xf] %v548
                %v550 = vld [vmem:[%s528 + $0x50] sm:$0xf]
                %551 = vst [vmem:[%s529 + $0x28] sm:$0xf] %v550
                %v552 = vld [vmem:[%s528 + $0x54] sm:$0xf]
                %553 = vst [vmem:[%s529 + $0x2c] sm:$0xf] %v552
                %v554 = vld [vmem:[%s528 + $0x60] sm:$0xf]
                %555 = vst [vmem:[%s529 + $0x30] sm:$0xf] %v554
                %v556 = vld [vmem:[%s528 + $0x64] sm:$0xf]
                %557 = vst [vmem:[%s529 + $0x34] sm:$0xf] %v556
                %v558 = vld [vmem:[%s528 + $0x70] sm:$0xf]
                %559 = vst [vmem:[%s529 + $0x38] sm:$0xf] %v558
                %v560 = vld [vmem:[%s528 + $0x74] sm:$0xf]
                %561 = vst [vmem:[%s529 + $0x3c] sm:$0xf] %v560
              $region110: #{prediction_head.1} parent=104 // loop_footer
                %s527 = sadd.s32 1, %s523
              $region111: #{prediction_head.1} parent=104 // loop_footer_branch
                %522 = sbr.rel target = $region107
              $region112: #{prediction_head.1} parent=104 // loop_exit
                _
            $region105: #{prediction_head.1} parent=96 // pred_fallthru
              _
          $region97: #{prediction_head.1} parent=92 // pred_fallthru
            _
          %613 = vnop
        $region93: #{prediction_head.1} parent=47 // pred_fallthru
          _
        // Predicated region
        $region131: #{prediction_head.1} parent=47 // pred_check
          %p614 = pneg %p132
        $region132: #{prediction_head.1} parent=47 // pred_check_branch
          %616 = sbr.rel (%p614) target = $region134
        $region133: #{prediction_head.1} parent=47 // pred_region
          %s617 = sand.u32 %s122, 1
          %s618 = sand.u32 %s122, 1
          %s619 = smul.addr %s618, 64
          %s620 = scalar_lea.vmem [#allocation9], %s619
          %s621 = smul.u32 8, %s28
          %s622 = smul.u32 2, %s29
          %s623 = smul.addr %s621, 4
          %s624 = sadd.s32 %s622, %s623
          %s625 = smul.addr %s624, 4
          %s626 = scalar_lea.vmem %s3, %s625
          // Predicated region
          $region135: #{prediction_head.1} parent=133 // pred_check
            _
          $region136: #{prediction_head.1} parent=133 // pred_check_branch
            %628 = sbr.rel (0) target = $region138
          $region137: #{prediction_head.1} parent=133 // pred_region
            // Predicated region
            $region139: #{prediction_head.1} parent=137 // pred_check
              _
            $region140: #{prediction_head.1} parent=137 // pred_check_branch
              %630 = sbr.rel target = $region142
            $region141: #{prediction_head.1} parent=137 // pred_region
              // Predicated region
              $region154: #{prediction_head.1} parent=141 // pred_check
                _
              $region155: #{prediction_head.1} parent=141 // pred_check_branch
                %675 = sbr.rel (0) target = $region157
              $region156: #{prediction_head.1} parent=141 // pred_region
                loop: start=0, step=1, limit=1
                $region158: #{prediction_head.1} parent=156 // loop_pre_header
                  _
                $region159: #{prediction_head.1} parent=156 // loop_header
                  %s677 = sphi 0, %s681
                  %p678 = scmp.ge.s32.totalorder %s677, 1
                  %s682 = sphi %s626, %s626
                  %s683 = sphi %s620, %s620
                $region160: #{prediction_head.1} parent=156 // loop_header_branch
                  %680 = sbr.rel (%p678) target = $region164
                $region161: #{prediction_head.1} parent=156 // loop_body
                  _
                $region162: #{prediction_head.1} parent=156 // loop_footer
                  %s681 = sadd.s32 1, %s677
                $region163: #{prediction_head.1} parent=156 // loop_footer_branch
                  %676 = sbr.rel target = $region159
                $region164: #{prediction_head.1} parent=156 // loop_exit
                  _
                loop: start=0, step=1, limit=1
                $region165: #{prediction_head.1} parent=156 // loop_pre_header
                  _
                $region166: #{prediction_head.1} parent=156 // loop_header
                  %s686 = sphi 0, %s690
                  %p687 = scmp.ge.s32.totalorder %s686, 1
                  %s691 = sphi %s626, %s626
                  %s692 = sphi %s620, %s620
                $region167: #{prediction_head.1} parent=156 // loop_header_branch
                  %689 = sbr.rel (%p687) target = $region171
                $region168: #{prediction_head.1} parent=156 // loop_body
                  %v693 = vld [vmem:[%s691] sm:$0xf]
                  %694 = vst [vmem:[%s692] sm:$0xf] %v693
                  %v695 = vld [vmem:[%s691 + $0x4] sm:$0xf]
                  %696 = vst [vmem:[%s692 + $0x4] sm:$0xf] %v695
                  %v697 = vld [vmem:[%s691 + $0x10] sm:$0xf]
                  %698 = vst [vmem:[%s692 + $0x8] sm:$0xf] %v697
                  %v699 = vld [vmem:[%s691 + $0x14] sm:$0xf]
                  %700 = vst [vmem:[%s692 + $0xc] sm:$0xf] %v699
                  %v701 = vld [vmem:[%s691 + $0x20] sm:$0xf]
                  %702 = vst [vmem:[%s692 + $0x10] sm:$0xf] %v701
                  %v703 = vld [vmem:[%s691 + $0x24] sm:$0xf]
                  %704 = vst [vmem:[%s692 + $0x14] sm:$0xf] %v703
                  %v705 = vld [vmem:[%s691 + $0x30] sm:$0xf]
                  %706 = vst [vmem:[%s692 + $0x18] sm:$0xf] %v705
                  %v707 = vld [vmem:[%s691 + $0x34] sm:$0xf]
                  %708 = vst [vmem:[%s692 + $0x1c] sm:$0xf] %v707
                  %v709 = vld [vmem:[%s691 + $0x40] sm:$0xf]
                  %710 = vst [vmem:[%s692 + $0x20] sm:$0xf] %v709
                  %v711 = vld [vmem:[%s691 + $0x44] sm:$0xf]
                  %712 = vst [vmem:[%s692 + $0x24] sm:$0xf] %v711
                  %v713 = vld [vmem:[%s691 + $0x50] sm:$0xf]
                  %714 = vst [vmem:[%s692 + $0x28] sm:$0xf] %v713
                  %v715 = vld [vmem:[%s691 + $0x54] sm:$0xf]
                  %716 = vst [vmem:[%s692 + $0x2c] sm:$0xf] %v715
                  %v717 = vld [vmem:[%s691 + $0x60] sm:$0xf]
                  %718 = vst [vmem:[%s692 + $0x30] sm:$0xf] %v717
                  %v719 = vld [vmem:[%s691 + $0x64] sm:$0xf]
                  %720 = vst [vmem:[%s692 + $0x34] sm:$0xf] %v719
                  %v721 = vld [vmem:[%s691 + $0x70] sm:$0xf]
                  %722 = vst [vmem:[%s692 + $0x38] sm:$0xf] %v721
                  %v723 = vld [vmem:[%s691 + $0x74] sm:$0xf]
                  %724 = vst [vmem:[%s692 + $0x3c] sm:$0xf] %v723
                $region169: #{prediction_head.1} parent=156 // loop_footer
                  %s690 = sadd.s32 1, %s686
                $region170: #{prediction_head.1} parent=156 // loop_footer_branch
                  %685 = sbr.rel target = $region166
                $region171: #{prediction_head.1} parent=156 // loop_exit
                  _
              $region157: #{prediction_head.1} parent=141 // pred_fallthru
                _
            $region142: #{prediction_head.1} parent=137 // pred_fallthru
              _
            // Predicated region
            $region143: #{prediction_head.1} parent=137 // pred_check
              _
            $region144: #{prediction_head.1} parent=137 // pred_check_branch
              %632 = sbr.rel (0) target = $region146
            $region145: #{prediction_head.1} parent=137 // pred_region
              loop: start=0, step=1, limit=1
              $region147: #{prediction_head.1} parent=145 // loop_pre_header
                _
              $region148: #{prediction_head.1} parent=145 // loop_header
                %s635 = sphi 0, %s639
                %p636 = scmp.ge.s32.totalorder %s635, 1
                %s640 = sphi %s626, %s626
                %s641 = sphi %s620, %s620
              $region149: #{prediction_head.1} parent=145 // loop_header_branch
                %638 = sbr.rel (%p636) target = $region153
              $region150: #{prediction_head.1} parent=145 // loop_body
                %v642 = vld [vmem:[%s640] sm:$0xf]
                %643 = vst [vmem:[%s641] sm:$0xf] %v642
                %v644 = vld [vmem:[%s640 + $0x4] sm:$0xf]
                %645 = vst [vmem:[%s641 + $0x4] sm:$0xf] %v644
                %v646 = vld [vmem:[%s640 + $0x10] sm:$0xf]
                %647 = vst [vmem:[%s641 + $0x8] sm:$0xf] %v646
                %v648 = vld [vmem:[%s640 + $0x14] sm:$0xf]
                %649 = vst [vmem:[%s641 + $0xc] sm:$0xf] %v648
                %v650 = vld [vmem:[%s640 + $0x20] sm:$0xf]
                %651 = vst [vmem:[%s641 + $0x10] sm:$0xf] %v650
                %v652 = vld [vmem:[%s640 + $0x24] sm:$0xf]
                %653 = vst [vmem:[%s641 + $0x14] sm:$0xf] %v652
                %v654 = vld [vmem:[%s640 + $0x30] sm:$0xf]
                %655 = vst [vmem:[%s641 + $0x18] sm:$0xf] %v654
                %v656 = vld [vmem:[%s640 + $0x34] sm:$0xf]
                %657 = vst [vmem:[%s641 + $0x1c] sm:$0xf] %v656
                %v658 = vld [vmem:[%s640 + $0x40] sm:$0xf]
                %659 = vst [vmem:[%s641 + $0x20] sm:$0xf] %v658
                %v660 = vld [vmem:[%s640 + $0x44] sm:$0xf]
                %661 = vst [vmem:[%s641 + $0x24] sm:$0xf] %v660
                %v662 = vld [vmem:[%s640 + $0x50] sm:$0xf]
                %663 = vst [vmem:[%s641 + $0x28] sm:$0xf] %v662
                %v664 = vld [vmem:[%s640 + $0x54] sm:$0xf]
                %665 = vst [vmem:[%s641 + $0x2c] sm:$0xf] %v664
                %v666 = vld [vmem:[%s640 + $0x60] sm:$0xf]
                %667 = vst [vmem:[%s641 + $0x30] sm:$0xf] %v666
                %v668 = vld [vmem:[%s640 + $0x64] sm:$0xf]
                %669 = vst [vmem:[%s641 + $0x34] sm:$0xf] %v668
                %v670 = vld [vmem:[%s640 + $0x70] sm:$0xf]
                %671 = vst [vmem:[%s641 + $0x38] sm:$0xf] %v670
                %v672 = vld [vmem:[%s640 + $0x74] sm:$0xf]
                %673 = vst [vmem:[%s641 + $0x3c] sm:$0xf] %v672
              $region151: #{prediction_head.1} parent=145 // loop_footer
                %s639 = sadd.s32 1, %s635
              $region152: #{prediction_head.1} parent=145 // loop_footer_branch
                %634 = sbr.rel target = $region148
              $region153: #{prediction_head.1} parent=145 // loop_exit
                _
            $region146: #{prediction_head.1} parent=137 // pred_fallthru
              _
          $region138: #{prediction_head.1} parent=133 // pred_fallthru
            _
          %725 = vnop
        $region134: #{prediction_head.1} parent=47 // pred_fallthru
          _
        // Predicated region
        $region172: #{prediction_head.1} parent=47 // pred_check
          %p726 = pneg %p160
        $region173: #{prediction_head.1} parent=47 // pred_check_branch
          %728 = sbr.rel (%p726) target = $region175
        $region174: #{prediction_head.1} parent=47 // pred_region
          %s729 = sand.u32 %s150, 1
          %s730 = sand.u32 %s150, 1
          %s731 = smul.addr %s730, 64
          %s732 = scalar_lea.vmem [#allocation10], %s731
          %s733 = smul.u32 8, %s28
          %s734 = smul.u32 2, %s29
          %s735 = smul.addr %s733, 4
          %s736 = sadd.s32 %s734, %s735
          %s737 = smul.addr %s736, 4
          %s738 = scalar_lea.vmem %s4, %s737
          // Predicated region
          $region176: #{prediction_head.1} parent=174 // pred_check
            _
          $region177: #{prediction_head.1} parent=174 // pred_check_branch
            %740 = sbr.rel (0) target = $region179
          $region178: #{prediction_head.1} parent=174 // pred_region
            // Predicated region
            $region180: #{prediction_head.1} parent=178 // pred_check
              _
            $region181: #{prediction_head.1} parent=178 // pred_check_branch
              %742 = sbr.rel target = $region183
            $region182: #{prediction_head.1} parent=178 // pred_region
              // Predicated region
              $region195: #{prediction_head.1} parent=182 // pred_check
                _
              $region196: #{prediction_head.1} parent=182 // pred_check_branch
                %787 = sbr.rel (0) target = $region198
              $region197: #{prediction_head.1} parent=182 // pred_region
                loop: start=0, step=1, limit=1
                $region199: #{prediction_head.1} parent=197 // loop_pre_header
                  _
                $region200: #{prediction_head.1} parent=197 // loop_header
                  %s789 = sphi 0, %s793
                  %p790 = scmp.ge.s32.totalorder %s789, 1
                  %s794 = sphi %s738, %s738
                  %s795 = sphi %s732, %s732
                $region201: #{prediction_head.1} parent=197 // loop_header_branch
                  %792 = sbr.rel (%p790) target = $region205
                $region202: #{prediction_head.1} parent=197 // loop_body
                  _
                $region203: #{prediction_head.1} parent=197 // loop_footer
                  %s793 = sadd.s32 1, %s789
                $region204: #{prediction_head.1} parent=197 // loop_footer_branch
                  %788 = sbr.rel target = $region200
                $region205: #{prediction_head.1} parent=197 // loop_exit
                  _
                loop: start=0, step=1, limit=1
                $region206: #{prediction_head.1} parent=197 // loop_pre_header
                  _
                $region207: #{prediction_head.1} parent=197 // loop_header
                  %s798 = sphi 0, %s802
                  %p799 = scmp.ge.s32.totalorder %s798, 1
                  %s803 = sphi %s738, %s738
                  %s804 = sphi %s732, %s732
                $region208: #{prediction_head.1} parent=197 // loop_header_branch
                  %801 = sbr.rel (%p799) target = $region212
                $region209: #{prediction_head.1} parent=197 // loop_body
                  %v805 = vld [vmem:[%s803] sm:$0xf]
                  %806 = vst [vmem:[%s804] sm:$0xf] %v805
                  %v807 = vld [vmem:[%s803 + $0x4] sm:$0xf]
                  %808 = vst [vmem:[%s804 + $0x4] sm:$0xf] %v807
                  %v809 = vld [vmem:[%s803 + $0x10] sm:$0xf]
                  %810 = vst [vmem:[%s804 + $0x8] sm:$0xf] %v809
                  %v811 = vld [vmem:[%s803 + $0x14] sm:$0xf]
                  %812 = vst [vmem:[%s804 + $0xc] sm:$0xf] %v811
                  %v813 = vld [vmem:[%s803 + $0x20] sm:$0xf]
                  %814 = vst [vmem:[%s804 + $0x10] sm:$0xf] %v813
                  %v815 = vld [vmem:[%s803 + $0x24] sm:$0xf]
                  %816 = vst [vmem:[%s804 + $0x14] sm:$0xf] %v815
                  %v817 = vld [vmem:[%s803 + $0x30] sm:$0xf]
                  %818 = vst [vmem:[%s804 + $0x18] sm:$0xf] %v817
                  %v819 = vld [vmem:[%s803 + $0x34] sm:$0xf]
                  %820 = vst [vmem:[%s804 + $0x1c] sm:$0xf] %v819
                  %v821 = vld [vmem:[%s803 + $0x40] sm:$0xf]
                  %822 = vst [vmem:[%s804 + $0x20] sm:$0xf] %v821
                  %v823 = vld [vmem:[%s803 + $0x44] sm:$0xf]
                  %824 = vst [vmem:[%s804 + $0x24] sm:$0xf] %v823
                  %v825 = vld [vmem:[%s803 + $0x50] sm:$0xf]
                  %826 = vst [vmem:[%s804 + $0x28] sm:$0xf] %v825
                  %v827 = vld [vmem:[%s803 + $0x54] sm:$0xf]
                  %828 = vst [vmem:[%s804 + $0x2c] sm:$0xf] %v827
                  %v829 = vld [vmem:[%s803 + $0x60] sm:$0xf]
                  %830 = vst [vmem:[%s804 + $0x30] sm:$0xf] %v829
                  %v831 = vld [vmem:[%s803 + $0x64] sm:$0xf]
                  %832 = vst [vmem:[%s804 + $0x34] sm:$0xf] %v831
                  %v833 = vld [vmem:[%s803 + $0x70] sm:$0xf]
                  %834 = vst [vmem:[%s804 + $0x38] sm:$0xf] %v833
                  %v835 = vld [vmem:[%s803 + $0x74] sm:$0xf]
                  %836 = vst [vmem:[%s804 + $0x3c] sm:$0xf] %v835
                $region210: #{prediction_head.1} parent=197 // loop_footer
                  %s802 = sadd.s32 1, %s798
                $region211: #{prediction_head.1} parent=197 // loop_footer_branch
                  %797 = sbr.rel target = $region207
                $region212: #{prediction_head.1} parent=197 // loop_exit
                  _
              $region198: #{prediction_head.1} parent=182 // pred_fallthru
                _
            $region183: #{prediction_head.1} parent=178 // pred_fallthru
              _
            // Predicated region
            $region184: #{prediction_head.1} parent=178 // pred_check
              _
            $region185: #{prediction_head.1} parent=178 // pred_check_branch
              %744 = sbr.rel (0) target = $region187
            $region186: #{prediction_head.1} parent=178 // pred_region
              loop: start=0, step=1, limit=1
              $region188: #{prediction_head.1} parent=186 // loop_pre_header
                _
              $region189: #{prediction_head.1} parent=186 // loop_header
                %s747 = sphi 0, %s751
                %p748 = scmp.ge.s32.totalorder %s747, 1
                %s752 = sphi %s738, %s738
                %s753 = sphi %s732, %s732
              $region190: #{prediction_head.1} parent=186 // loop_header_branch
                %750 = sbr.rel (%p748) target = $region194
              $region191: #{prediction_head.1} parent=186 // loop_body
                %v754 = vld [vmem:[%s752] sm:$0xf]
                %755 = vst [vmem:[%s753] sm:$0xf] %v754
                %v756 = vld [vmem:[%s752 + $0x4] sm:$0xf]
                %757 = vst [vmem:[%s753 + $0x4] sm:$0xf] %v756
                %v758 = vld [vmem:[%s752 + $0x10] sm:$0xf]
                %759 = vst [vmem:[%s753 + $0x8] sm:$0xf] %v758
                %v760 = vld [vmem:[%s752 + $0x14] sm:$0xf]
                %761 = vst [vmem:[%s753 + $0xc] sm:$0xf] %v760
                %v762 = vld [vmem:[%s752 + $0x20] sm:$0xf]
                %763 = vst [vmem:[%s753 + $0x10] sm:$0xf] %v762
                %v764 = vld [vmem:[%s752 + $0x24] sm:$0xf]
                %765 = vst [vmem:[%s753 + $0x14] sm:$0xf] %v764
                %v766 = vld [vmem:[%s752 + $0x30] sm:$0xf]
                %767 = vst [vmem:[%s753 + $0x18] sm:$0xf] %v766
                %v768 = vld [vmem:[%s752 + $0x34] sm:$0xf]
                %769 = vst [vmem:[%s753 + $0x1c] sm:$0xf] %v768
                %v770 = vld [vmem:[%s752 + $0x40] sm:$0xf]
                %771 = vst [vmem:[%s753 + $0x20] sm:$0xf] %v770
                %v772 = vld [vmem:[%s752 + $0x44] sm:$0xf]
                %773 = vst [vmem:[%s753 + $0x24] sm:$0xf] %v772
                %v774 = vld [vmem:[%s752 + $0x50] sm:$0xf]
                %775 = vst [vmem:[%s753 + $0x28] sm:$0xf] %v774
                %v776 = vld [vmem:[%s752 + $0x54] sm:$0xf]
                %777 = vst [vmem:[%s753 + $0x2c] sm:$0xf] %v776
                %v778 = vld [vmem:[%s752 + $0x60] sm:$0xf]
                %779 = vst [vmem:[%s753 + $0x30] sm:$0xf] %v778
                %v780 = vld [vmem:[%s752 + $0x64] sm:$0xf]
                %781 = vst [vmem:[%s753 + $0x34] sm:$0xf] %v780
                %v782 = vld [vmem:[%s752 + $0x70] sm:$0xf]
                %783 = vst [vmem:[%s753 + $0x38] sm:$0xf] %v782
                %v784 = vld [vmem:[%s752 + $0x74] sm:$0xf]
                %785 = vst [vmem:[%s753 + $0x3c] sm:$0xf] %v784
              $region192: #{prediction_head.1} parent=186 // loop_footer
                %s751 = sadd.s32 1, %s747
              $region193: #{prediction_head.1} parent=186 // loop_footer_branch
                %746 = sbr.rel target = $region189
              $region194: #{prediction_head.1} parent=186 // loop_exit
                _
            $region187: #{prediction_head.1} parent=178 // pred_fallthru
              _
          $region179: #{prediction_head.1} parent=174 // pred_fallthru
            _
          %837 = vnop
        $region175: #{prediction_head.1} parent=47 // pred_fallthru
          _
      $region48: #{prediction_head.1} parent=5 // pred_fallthru
        _
      %p838 = scmp.le.s32.totalorder 1, %s21
      %p839 = scmp.lt.s32.totalorder %s21, 5
      %p840 = pnand %p838, %p839
      %p841 = pneg %p840
      // Predicated region
      $region213: #{prediction_head.1} parent=5 // pred_check
        _
      $region214: #{prediction_head.1} parent=5 // pred_check_branch
        %843 = sbr.rel (%p840) target = $region216
      $region215: #{prediction_head.1} parent=5 // pred_region
        %s844 = ssub.s32 %s21, 1
        // Predicated region
        $region217: #{prediction_head.1} parent=215 // pred_check
          %p845 = pneg %p54
        $region218: #{prediction_head.1} parent=215 // pred_check_branch
          %847 = sbr.rel (%p845) target = $region220
        $region219: #{prediction_head.1} parent=215 // pred_region
          %848 = dma.done [#allocation6], 16
        $region220: #{prediction_head.1} parent=215 // pred_fallthru
          _
        %s849 = sand.u32 %s69, 1
        %s850 = sand.u32 %s69, 1
        %s851 = smul.addr %s850, 64
        %s852 = scalar_lea.vmem [#allocation7], %s851
        // Predicated region
        $region221: #{prediction_head.1} parent=215 // pred_check
          %p853 = pneg %p82
        $region222: #{prediction_head.1} parent=215 // pred_check_branch
          %855 = sbr.rel (%p853) target = $region224
        $region223: #{prediction_head.1} parent=215 // pred_region
          _
        $region224: #{prediction_head.1} parent=215 // pred_fallthru
          _
        %s856 = sand.u32 %s97, 1
        %s857 = sand.u32 %s97, 1
        %s858 = smul.addr %s857, 64
        %s859 = scalar_lea.vmem [#allocation8], %s858
        // Predicated region
        $region225: #{prediction_head.1} parent=215 // pred_check
          %p860 = pneg %p110
        $region226: #{prediction_head.1} parent=215 // pred_check_branch
          %862 = sbr.rel (%p860) target = $region228
        $region227: #{prediction_head.1} parent=215 // pred_region
          _
        $region228: #{prediction_head.1} parent=215 // pred_fallthru
          _
        %s863 = sand.u32 %s125, 1
        %s864 = sand.u32 %s125, 1
        %s865 = smul.addr %s864, 64
        %s866 = scalar_lea.vmem [#allocation9], %s865
        // Predicated region
        $region229: #{prediction_head.1} parent=215 // pred_check
          %p867 = pneg %p138
        $region230: #{prediction_head.1} parent=215 // pred_check_branch
          %869 = sbr.rel (%p867) target = $region232
        $region231: #{prediction_head.1} parent=215 // pred_region
          _
        $region232: #{prediction_head.1} parent=215 // pred_fallthru
          _
        %s870 = sand.u32 %s153, 1
        %s871 = sand.u32 %s153, 1
        %s872 = smul.addr %s871, 64
        %s873 = scalar_lea.vmem [#allocation10], %s872
        // Predicated region
        $region233: #{prediction_head.1} parent=215 // pred_check
          %p874 = pneg %p166
        $region234: #{prediction_head.1} parent=215 // pred_check_branch
          %876 = sbr.rel (%p874) target = $region236
        $region235: #{prediction_head.1} parent=215 // pred_region
          _
        $region236: #{prediction_head.1} parent=215 // pred_fallthru
          _
        %877 = sfence
        %p878 = pneg %p54
        %p879 = pneg %p51
        %s880 = sand.u32 %s69, 1
        %s881 = sand.u32 %s69, 1
        %s882 = smul.addr %s881, 64
        %s883 = scalar_lea.vmem [#allocation7], %s882
        %p884 = pneg %p82
        %p885 = pneg %p79
        %s886 = sand.u32 %s97, 1
        %s887 = sand.u32 %s97, 1
        %s888 = smul.addr %s887, 64
        %s889 = scalar_lea.vmem [#allocation8], %s888
        %p890 = pneg %p110
        %p891 = pneg %p107
        %s892 = sand.u32 %s125, 1
        %s893 = sand.u32 %s125, 1
        %s894 = smul.addr %s893, 64
        %s895 = scalar_lea.vmem [#allocation9], %s894
        %p896 = pneg %p138
        %p897 = pneg %p135
        %s898 = sand.u32 %s153, 1
        %s899 = sand.u32 %s153, 1
        %s900 = smul.addr %s899, 64
        %s901 = scalar_lea.vmem [#allocation10], %s900
        %p902 = pneg %p166
        %p903 = pneg %p163
        %p904 = pneg %p187
        %p905 = pneg %p184
        %p906 = pneg %p208
        %p907 = pneg %p205
        %p908 = pneg %p229
        %p909 = pneg %p226
        %p910 = pneg %p250
        %p911 = pneg %p247
        %p912 = pneg %p271
        %p913 = pneg %p268
        %p914 = pneg %p292
        %p915 = pneg %p289
        %p916 = pneg %p313
        %p917 = pneg %p310
        %p918 = pneg %p339
        %p919 = pneg %p336
        %p920 = scmp.lt.s32.totalorder %s30, 1
        %s921 = scalar_select %p920, %s30, 1
        %s922 = smul.addr %s921, 8
        %s923 = scalar_lea.vmem %s12, %s922
        %s924 = smul.u32 8, %s30
        %s925 = smul.u32 2, %s31
        %s926 = smul.u32 8, %s30
        %s927 = smul.u32 2, %s31
        %s928 = smul.u32 8, %s30
        %s929 = smul.u32 2, %s31
        %s930 = smul.u32 8, %s30
        %s931 = smul.u32 2, %s31
        %p932 = scmp.lt.s32.totalorder %s30, 1
        %s933 = scalar_select %p932, %s30, 1
        %s934 = smul.addr %s933, 8
        %s935 = scalar_lea.vmem %s12, %s934
        %p936 = scmp.eq.s32.totalorder %s31, 0
        // Predicated region
        $region237: #{prediction_head.1} parent=215 // pred_check
          %p937 = pneg %p936
        $region238: #{prediction_head.1} parent=215 // pred_check_branch
          %939 = sbr.rel (%p937) target = $region240
        $region239: #{prediction_head.1} parent=215 // pred_region
          %940 = vst [vmem:[#allocation2] sm:$0xff] 0.0
          %941 = vst [vmem:[#allocation3] sm:$0xff] 0.0
        $region240: #{prediction_head.1} parent=215 // pred_fallthru
          _
        %v942 = vld [vmem:[%s852] sm:$0xf]
        %v943 = vld [vmem:[%s852 + $0x4] sm:$0xf]
        %v944 = vld [vmem:[%s852 + $0x8] sm:$0xf]
        %v945 = vld [vmem:[%s852 + $0xc] sm:$0xf]
        %v946 = vld [vmem:[%s852 + $0x10] sm:$0xf]
        %v947 = vld [vmem:[%s852 + $0x14] sm:$0xf]
        %v948 = vld [vmem:[%s852 + $0x18] sm:$0xf]
        %v949 = vld [vmem:[%s852 + $0x1c] sm:$0xf]
        %v950 = vld [vmem:[%s852 + $0x20] sm:$0xf]
        %v951 = vld [vmem:[%s852 + $0x24] sm:$0xf]
        %v952 = vld [vmem:[%s852 + $0x28] sm:$0xf]
        %v953 = vld [vmem:[%s852 + $0x2c] sm:$0xf]
        %v954 = vld [vmem:[%s852 + $0x30] sm:$0xf]
        %v955 = vld [vmem:[%s852 + $0x34] sm:$0xf]
        %v956 = vld [vmem:[%s852 + $0x38] sm:$0xf]
        %v957 = vld [vmem:[%s852 + $0x3c] sm:$0xf]
        %v958 = vunpack.c.l.bf16 %v942
        %v959 = vunpack.c.l.bf16 %v943
        %v960 = vunpack.c.l.bf16 %v944
        %v961 = vunpack.c.l.bf16 %v945
        %v962 = vunpack.c.l.bf16 %v946
        %v963 = vunpack.c.l.bf16 %v947
        %v964 = vunpack.c.l.bf16 %v948
        %v965 = vunpack.c.l.bf16 %v949
        %v966 = vunpack.c.l.bf16 %v950
        %v967 = vunpack.c.l.bf16 %v951
        %v968 = vunpack.c.l.bf16 %v952
        %v969 = vunpack.c.l.bf16 %v953
        %v970 = vunpack.c.l.bf16 %v954
        %v971 = vunpack.c.l.bf16 %v955
        %v972 = vunpack.c.l.bf16 %v956
        %v973 = vunpack.c.l.bf16 %v957
        %s974 = sld [smem:[#allocation5]]
        %v975 = vstv %s974
        %v976 = vmul.f32 %v958, %v975
        %v977 = vmul.f32 %v959, %v975
        %v978 = vmul.f32 %v960, %v975
        %v979 = vmul.f32 %v961, %v975
        %v980 = vmul.f32 %v962, %v975
        %v981 = vmul.f32 %v963, %v975
        %v982 = vmul.f32 %v964, %v975
        %v983 = vmul.f32 %v965, %v975
        %v984 = vmul.f32 %v966, %v975
        %v985 = vmul.f32 %v967, %v975
        %v986 = vmul.f32 %v968, %v975
        %v987 = vmul.f32 %v969, %v975
        %v988 = vmul.f32 %v970, %v975
        %v989 = vmul.f32 %v971, %v975
        %v990 = vmul.f32 %v972, %v975
        %v991 = vmul.f32 %v973, %v975
        %v992 = vld [vmem:[%s859] sm:$0xf]
        %v993 = vld [vmem:[%s859 + $0x4] sm:$0xf]
        %v994 = vld [vmem:[%s859 + $0x8] sm:$0xf]
        %v995 = vld [vmem:[%s859 + $0xc] sm:$0xf]
        %v996 = vld [vmem:[%s859 + $0x10] sm:$0xf]
        %v997 = vld [vmem:[%s859 + $0x14] sm:$0xf]
        %v998 = vld [vmem:[%s859 + $0x18] sm:$0xf]
        %v999 = vld [vmem:[%s859 + $0x1c] sm:$0xf]
        %v1000 = vld [vmem:[%s859 + $0x20] sm:$0xf]
        %v1001 = vld [vmem:[%s859 + $0x24] sm:$0xf]
        %v1002 = vld [vmem:[%s859 + $0x28] sm:$0xf]
        %v1003 = vld [vmem:[%s859 + $0x2c] sm:$0xf]
        %v1004 = vld [vmem:[%s859 + $0x30] sm:$0xf]
        %v1005 = vld [vmem:[%s859 + $0x34] sm:$0xf]
        %v1006 = vld [vmem:[%s859 + $0x38] sm:$0xf]
        %v1007 = vld [vmem:[%s859 + $0x3c] sm:$0xf]
        %v1008 = vunpack.c.l.bf16 %v992
        %v1009 = vunpack.c.l.bf16 %v993
        %v1010 = vunpack.c.l.bf16 %v994
        %v1011 = vunpack.c.l.bf16 %v995
        %v1012 = vunpack.c.l.bf16 %v996
        %v1013 = vunpack.c.l.bf16 %v997
        %v1014 = vunpack.c.l.bf16 %v998
        %v1015 = vunpack.c.l.bf16 %v999
        %v1016 = vunpack.c.l.bf16 %v1000
        %v1017 = vunpack.c.l.bf16 %v1001
        %v1018 = vunpack.c.l.bf16 %v1002
        %v1019 = vunpack.c.l.bf16 %v1003
        %v1020 = vunpack.c.l.bf16 %v1004
        %v1021 = vunpack.c.l.bf16 %v1005
        %v1022 = vunpack.c.l.bf16 %v1006
        %v1023 = vunpack.c.l.bf16 %v1007
        %s1024 = sld [smem:[#allocation5 + $0x1]]
        %v1025 = vstv %s1024
        %v1026 = vmul.f32 %v1008, %v1025
        %v1027 = vmul.f32 %v1009, %v1025
        %v1028 = vmul.f32 %v1010, %v1025
        %v1029 = vmul.f32 %v1011, %v1025
        %v1030 = vmul.f32 %v1012, %v1025
        %v1031 = vmul.f32 %v1013, %v1025
        %v1032 = vmul.f32 %v1014, %v1025
        %v1033 = vmul.f32 %v1015, %v1025
        %v1034 = vmul.f32 %v1016, %v1025
        %v1035 = vmul.f32 %v1017, %v1025
        %v1036 = vmul.f32 %v1018, %v1025
        %v1037 = vmul.f32 %v1019, %v1025
        %v1038 = vmul.f32 %v1020, %v1025
        %v1039 = vmul.f32 %v1021, %v1025
        %v1040 = vmul.f32 %v1022, %v1025
        %v1041 = vmul.f32 %v1023, %v1025
        %v1042 = vadd.f32 %v976, %v1026
        %v1043 = vadd.f32 %v977, %v1027
        %v1044 = vadd.f32 %v978, %v1028
        %v1045 = vadd.f32 %v979, %v1029
        %v1046 = vadd.f32 %v980, %v1030
        %v1047 = vadd.f32 %v981, %v1031
        %v1048 = vadd.f32 %v982, %v1032
        %v1049 = vadd.f32 %v983, %v1033
        %v1050 = vadd.f32 %v984, %v1034
        %v1051 = vadd.f32 %v985, %v1035
        %v1052 = vadd.f32 %v986, %v1036
        %v1053 = vadd.f32 %v987, %v1037
        %v1054 = vadd.f32 %v988, %v1038
        %v1055 = vadd.f32 %v989, %v1039
        %v1056 = vadd.f32 %v990, %v1040
        %v1057 = vadd.f32 %v991, %v1041
        %v1058 = vld [vmem:[%s866] sm:$0xf]
        %v1059 = vld [vmem:[%s866 + $0x4] sm:$0xf]
        %v1060 = vld [vmem:[%s866 + $0x8] sm:$0xf]
        %v1061 = vld [vmem:[%s866 + $0xc] sm:$0xf]
        %v1062 = vld [vmem:[%s866 + $0x10] sm:$0xf]
        %v1063 = vld [vmem:[%s866 + $0x14] sm:$0xf]
        %v1064 = vld [vmem:[%s866 + $0x18] sm:$0xf]
        %v1065 = vld [vmem:[%s866 + $0x1c] sm:$0xf]
        %v1066 = vld [vmem:[%s866 + $0x20] sm:$0xf]
        %v1067 = vld [vmem:[%s866 + $0x24] sm:$0xf]
        %v1068 = vld [vmem:[%s866 + $0x28] sm:$0xf]
        %v1069 = vld [vmem:[%s866 + $0x2c] sm:$0xf]
        %v1070 = vld [vmem:[%s866 + $0x30] sm:$0xf]
        %v1071 = vld [vmem:[%s866 + $0x34] sm:$0xf]
        %v1072 = vld [vmem:[%s866 + $0x38] sm:$0xf]
        %v1073 = vld [vmem:[%s866 + $0x3c] sm:$0xf]
        %v1074 = vunpack.c.l.bf16 %v1058
        %v1075 = vunpack.c.l.bf16 %v1059
        %v1076 = vunpack.c.l.bf16 %v1060
        %v1077 = vunpack.c.l.bf16 %v1061
        %v1078 = vunpack.c.l.bf16 %v1062
        %v1079 = vunpack.c.l.bf16 %v1063
        %v1080 = vunpack.c.l.bf16 %v1064
        %v1081 = vunpack.c.l.bf16 %v1065
        %v1082 = vunpack.c.l.bf16 %v1066
        %v1083 = vunpack.c.l.bf16 %v1067
        %v1084 = vunpack.c.l.bf16 %v1068
        %v1085 = vunpack.c.l.bf16 %v1069
        %v1086 = vunpack.c.l.bf16 %v1070
        %v1087 = vunpack.c.l.bf16 %v1071
        %v1088 = vunpack.c.l.bf16 %v1072
        %v1089 = vunpack.c.l.bf16 %v1073
        %s1090 = sld [smem:[#allocation5 + $0x2]]
        %v1091 = vstv %s1090
        %v1092 = vmul.f32 %v1074, %v1091
        %v1093 = vmul.f32 %v1075, %v1091
        %v1094 = vmul.f32 %v1076, %v1091
        %v1095 = vmul.f32 %v1077, %v1091
        %v1096 = vmul.f32 %v1078, %v1091
        %v1097 = vmul.f32 %v1079, %v1091
        %v1098 = vmul.f32 %v1080, %v1091
        %v1099 = vmul.f32 %v1081, %v1091
        %v1100 = vmul.f32 %v1082, %v1091
        %v1101 = vmul.f32 %v1083, %v1091
        %v1102 = vmul.f32 %v1084, %v1091
        %v1103 = vmul.f32 %v1085, %v1091
        %v1104 = vmul.f32 %v1086, %v1091
        %v1105 = vmul.f32 %v1087, %v1091
        %v1106 = vmul.f32 %v1088, %v1091
        %v1107 = vmul.f32 %v1089, %v1091
        %v1108 = vadd.f32 %v1042, %v1092
        %v1109 = vadd.f32 %v1043, %v1093
        %v1110 = vadd.f32 %v1044, %v1094
        %v1111 = vadd.f32 %v1045, %v1095
        %v1112 = vadd.f32 %v1046, %v1096
        %v1113 = vadd.f32 %v1047, %v1097
        %v1114 = vadd.f32 %v1048, %v1098
        %v1115 = vadd.f32 %v1049, %v1099
        %v1116 = vadd.f32 %v1050, %v1100
        %v1117 = vadd.f32 %v1051, %v1101
        %v1118 = vadd.f32 %v1052, %v1102
        %v1119 = vadd.f32 %v1053, %v1103
        %v1120 = vadd.f32 %v1054, %v1104
        %v1121 = vadd.f32 %v1055, %v1105
        %v1122 = vadd.f32 %v1056, %v1106
        %v1123 = vadd.f32 %v1057, %v1107
        %v1124 = vld [vmem:[%s873] sm:$0xf]
        %v1125 = vld [vmem:[%s873 + $0x4] sm:$0xf]
        %v1126 = vld [vmem:[%s873 + $0x8] sm:$0xf]
        %v1127 = vld [vmem:[%s873 + $0xc] sm:$0xf]
        %v1128 = vld [vmem:[%s873 + $0x10] sm:$0xf]
        %v1129 = vld [vmem:[%s873 + $0x14] sm:$0xf]
        %v1130 = vld [vmem:[%s873 + $0x18] sm:$0xf]
        %v1131 = vld [vmem:[%s873 + $0x1c] sm:$0xf]
        %v1132 = vld [vmem:[%s873 + $0x20] sm:$0xf]
        %v1133 = vld [vmem:[%s873 + $0x24] sm:$0xf]
        %v1134 = vld [vmem:[%s873 + $0x28] sm:$0xf]
        %v1135 = vld [vmem:[%s873 + $0x2c] sm:$0xf]
        %v1136 = vld [vmem:[%s873 + $0x30] sm:$0xf]
        %v1137 = vld [vmem:[%s873 + $0x34] sm:$0xf]
        %v1138 = vld [vmem:[%s873 + $0x38] sm:$0xf]
        %v1139 = vld [vmem:[%s873 + $0x3c] sm:$0xf]
        %v1140 = vunpack.c.l.bf16 %v1124
        %v1141 = vunpack.c.l.bf16 %v1125
        %v1142 = vunpack.c.l.bf16 %v1126
        %v1143 = vunpack.c.l.bf16 %v1127
        %v1144 = vunpack.c.l.bf16 %v1128
        %v1145 = vunpack.c.l.bf16 %v1129
        %v1146 = vunpack.c.l.bf16 %v1130
        %v1147 = vunpack.c.l.bf16 %v1131
        %v1148 = vunpack.c.l.bf16 %v1132
        %v1149 = vunpack.c.l.bf16 %v1133
        %v1150 = vunpack.c.l.bf16 %v1134
        %v1151 = vunpack.c.l.bf16 %v1135
        %v1152 = vunpack.c.l.bf16 %v1136
        %v1153 = vunpack.c.l.bf16 %v1137
        %v1154 = vunpack.c.l.bf16 %v1138
        %v1155 = vunpack.c.l.bf16 %v1139
        %s1156 = sld [smem:[#allocation5 + $0x3]]
        %v1157 = vstv %s1156
        %v1158 = vmul.f32 %v1140, %v1157
        %v1159 = vmul.f32 %v1141, %v1157
        %v1160 = vmul.f32 %v1142, %v1157
        %v1161 = vmul.f32 %v1143, %v1157
        %v1162 = vmul.f32 %v1144, %v1157
        %v1163 = vmul.f32 %v1145, %v1157
        %v1164 = vmul.f32 %v1146, %v1157
        %v1165 = vmul.f32 %v1147, %v1157
        %v1166 = vmul.f32 %v1148, %v1157
        %v1167 = vmul.f32 %v1149, %v1157
        %v1168 = vmul.f32 %v1150, %v1157
        %v1169 = vmul.f32 %v1151, %v1157
        %v1170 = vmul.f32 %v1152, %v1157
        %v1171 = vmul.f32 %v1153, %v1157
        %v1172 = vmul.f32 %v1154, %v1157
        %v1173 = vmul.f32 %v1155, %v1157
        %v1174 = vadd.f32 %v1108, %v1158
        %v1175 = vadd.f32 %v1109, %v1159
        %v1176 = vadd.f32 %v1110, %v1160
        %v1177 = vadd.f32 %v1111, %v1161
        %v1178 = vadd.f32 %v1112, %v1162
        %v1179 = vadd.f32 %v1113, %v1163
        %v1180 = vadd.f32 %v1114, %v1164
        %v1181 = vadd.f32 %v1115, %v1165
        %v1182 = vadd.f32 %v1116, %v1166
        %v1183 = vadd.f32 %v1117, %v1167
        %v1184 = vadd.f32 %v1118, %v1168
        %v1185 = vadd.f32 %v1119, %v1169
        %v1186 = vadd.f32 %v1120, %v1170
        %v1187 = vadd.f32 %v1121, %v1171
        %v1188 = vadd.f32 %v1122, %v1172
        %v1189 = vadd.f32 %v1123, %v1173
        %v1190 = vld [vmem:[#allocation2] sm:$0xff]
        %v1191 = vadd.f32 %v1174, %v1175
        %v1192 = vrot.slane %v1191, 4
        %v1193 = vadd.f32 %v1191, %v1192
        %v1194 = vrot.slane %v1193, 2
        %v1195 = vadd.f32 %v1193, %v1194
        %v1196 = vrot.slane %v1195, 1
        %v1197 = vadd.f32 %v1195, %v1196
        %v1198 = vadd.f32 %v1176, %v1177
        %v1199 = vrot.slane %v1198, 4
        %v1200 = vadd.f32 %v1198, %v1199
        %v1201 = vrot.slane %v1200, 2
        %v1202 = vadd.f32 %v1200, %v1201
        %v1203 = vrot.slane %v1202, 1
        %v1204 = vadd.f32 %v1202, %v1203
        %v1205 = vadd.f32 %v1178, %v1179
        %v1206 = vrot.slane %v1205, 4
        %v1207 = vadd.f32 %v1205, %v1206
        %v1208 = vrot.slane %v1207, 2
        %v1209 = vadd.f32 %v1207, %v1208
        %v1210 = vrot.slane %v1209, 1
        %v1211 = vadd.f32 %v1209, %v1210
        %v1212 = vadd.f32 %v1180, %v1181
        %v1213 = vrot.slane %v1212, 4
        %v1214 = vadd.f32 %v1212, %v1213
        %v1215 = vrot.slane %v1214, 2
        %v1216 = vadd.f32 %v1214, %v1215
        %v1217 = vrot.slane %v1216, 1
        %v1218 = vadd.f32 %v1216, %v1217
        %v1219 = vadd.f32 %v1182, %v1183
        %v1220 = vrot.slane %v1219, 4
        %v1221 = vadd.f32 %v1219, %v1220
        %v1222 = vrot.slane %v1221, 2
        %v1223 = vadd.f32 %v1221, %v1222
        %v1224 = vrot.slane %v1223, 1
        %v1225 = vadd.f32 %v1223, %v1224
        %v1226 = vadd.f32 %v1184, %v1185
        %v1227 = vrot.slane %v1226, 4
        %v1228 = vadd.f32 %v1226, %v1227
        %v1229 = vrot.slane %v1228, 2
        %v1230 = vadd.f32 %v1228, %v1229
        %v1231 = vrot.slane %v1230, 1
        %v1232 = vadd.f32 %v1230, %v1231
        %v1233 = vadd.f32 %v1186, %v1187
        %v1234 = vrot.slane %v1233, 4
        %v1235 = vadd.f32 %v1233, %v1234
        %v1236 = vrot.slane %v1235, 2
        %v1237 = vadd.f32 %v1235, %v1236
        %v1238 = vrot.slane %v1237, 1
        %v1239 = vadd.f32 %v1237, %v1238
        %v1240 = vadd.f32 %v1188, %v1189
        %v1241 = vrot.slane %v1240, 4
        %v1242 = vadd.f32 %v1240, %v1241
        %v1243 = vrot.slane %v1242, 2
        %v1244 = vadd.f32 %v1242, %v1243
        %v1245 = vrot.slane %v1244, 1
        %v1246 = vadd.f32 %v1244, %v1245
        %vm1255 = vcmask 1041409
        %v1256 = vsel %vm1255, %v1204, %v1197
        %vm1257 = vcmask 1042434
        %v1258 = vsel %vm1257, %v1211, %v1256
        %vm1259 = vcmask 1043459
        %v1260 = vsel %vm1259, %v1218, %v1258
        %vm1261 = vcmask 1044484
        %v1262 = vsel %vm1261, %v1225, %v1260
        %vm1263 = vcmask 1045509
        %v1264 = vsel %vm1263, %v1232, %v1262
        %vm1265 = vcmask 1046534
        %v1266 = vsel %vm1265, %v1239, %v1264
        %vm1267 = vcmask 1047559
        %v1268 = vsel %vm1267, %v1246, %v1266
        %v1270 = vadd.f32 %v1190, %v1268
        %1271 = vst [vmem:[#allocation2] sm:$0xff] %v1270
        %v1272 = vld [vmem:[#allocation3] sm:$0xff]
        %v1273 = vmul.f32 %v1174, %v1174
        %v1274 = vmul.f32 %v1175, %v1175
        %v1275 = vmul.f32 %v1176, %v1176
        %v1276 = vmul.f32 %v1177, %v1177
        %v1277 = vmul.f32 %v1178, %v1178
        %v1278 = vmul.f32 %v1179, %v1179
        %v1279 = vmul.f32 %v1180, %v1180
        %v1280 = vmul.f32 %v1181, %v1181
        %v1281 = vmul.f32 %v1182, %v1182
        %v1282 = vmul.f32 %v1183, %v1183
        %v1283 = vmul.f32 %v1184, %v1184
        %v1284 = vmul.f32 %v1185, %v1185
        %v1285 = vmul.f32 %v1186, %v1186
        %v1286 = vmul.f32 %v1187, %v1187
        %v1287 = vmul.f32 %v1188, %v1188
        %v1288 = vmul.f32 %v1189, %v1189
        %v1289 = vadd.f32 %v1273, %v1274
        %v1290 = vrot.slane %v1289, 4
        %v1291 = vadd.f32 %v1289, %v1290
        %v1292 = vrot.slane %v1291, 2
        %v1293 = vadd.f32 %v1291, %v1292
        %v1294 = vrot.slane %v1293, 1
        %v1295 = vadd.f32 %v1293, %v1294
        %v1296 = vadd.f32 %v1275, %v1276
        %v1297 = vrot.slane %v1296, 4
        %v1298 = vadd.f32 %v1296, %v1297
        %v1299 = vrot.slane %v1298, 2
        %v1300 = vadd.f32 %v1298, %v1299
        %v1301 = vrot.slane %v1300, 1
        %v1302 = vadd.f32 %v1300, %v1301
        %v1303 = vadd.f32 %v1277, %v1278
        %v1304 = vrot.slane %v1303, 4
        %v1305 = vadd.f32 %v1303, %v1304
        %v1306 = vrot.slane %v1305, 2
        %v1307 = vadd.f32 %v1305, %v1306
        %v1308 = vrot.slane %v1307, 1
        %v1309 = vadd.f32 %v1307, %v1308
        %v1310 = vadd.f32 %v1279, %v1280
        %v1311 = vrot.slane %v1310, 4
        %v1312 = vadd.f32 %v1310, %v1311
        %v1313 = vrot.slane %v1312, 2
        %v1314 = vadd.f32 %v1312, %v1313
        %v1315 = vrot.slane %v1314, 1
        %v1316 = vadd.f32 %v1314, %v1315
        %v1317 = vadd.f32 %v1281, %v1282
        %v1318 = vrot.slane %v1317, 4
        %v1319 = vadd.f32 %v1317, %v1318
        %v1320 = vrot.slane %v1319, 2
        %v1321 = vadd.f32 %v1319, %v1320
        %v1322 = vrot.slane %v1321, 1
        %v1323 = vadd.f32 %v1321, %v1322
        %v1324 = vadd.f32 %v1283, %v1284
        %v1325 = vrot.slane %v1324, 4
        %v1326 = vadd.f32 %v1324, %v1325
        %v1327 = vrot.slane %v1326, 2
        %v1328 = vadd.f32 %v1326, %v1327
        %v1329 = vrot.slane %v1328, 1
        %v1330 = vadd.f32 %v1328, %v1329
        %v1331 = vadd.f32 %v1285, %v1286
        %v1332 = vrot.slane %v1331, 4
        %v1333 = vadd.f32 %v1331, %v1332
        %v1334 = vrot.slane %v1333, 2
        %v1335 = vadd.f32 %v1333, %v1334
        %v1336 = vrot.slane %v1335, 1
        %v1337 = vadd.f32 %v1335, %v1336
        %v1338 = vadd.f32 %v1287, %v1288
        %v1339 = vrot.slane %v1338, 4
        %v1340 = vadd.f32 %v1338, %v1339
        %v1341 = vrot.slane %v1340, 2
        %v1342 = vadd.f32 %v1340, %v1341
        %v1343 = vrot.slane %v1342, 1
        %v1344 = vadd.f32 %v1342, %v1343
        %v1353 = vsel %vm1255, %v1302, %v1295
        %v1354 = vsel %vm1257, %v1309, %v1353
        %v1355 = vsel %vm1259, %v1316, %v1354
        %v1356 = vsel %vm1261, %v1323, %v1355
        %v1357 = vsel %vm1263, %v1330, %v1356
        %v1358 = vsel %vm1265, %v1337, %v1357
        %v1359 = vsel %vm1267, %v1344, %v1358
        %v1361 = vadd.f32 %v1272, %v1359
        %1362 = vst [vmem:[#allocation3] sm:$0xff] %v1361
        %p1363 = scmp.eq.s32.totalorder %s31, 1
        // Predicated region
        $region241: #{prediction_head.1} parent=215 // pred_check
          %p1364 = pneg %p1363
        $region242: #{prediction_head.1} parent=215 // pred_check_branch
          %1366 = sbr.rel (%p1364) target = $region244
        $region243: #{prediction_head.1} parent=215 // pred_region
          %v1367 = vld [vmem:[#allocation2] sm:$0xff]
          %1369 = vrot.lane.b32.xlu0 %v1367, 96
          %v1370 = vpop.permute.xlu0 %1369
          %v1372 = vadd.f32 %v1367, %v1370
          %1373 = vrot.lane.b32.xlu0 %v1367, 64
          %v1374 = vpop.permute.xlu0 %1373
          %v1376 = vadd.f32 %v1372, %v1374
          %1377 = vrot.lane.b32.xlu0 %v1367, 32
          %v1378 = vpop.permute.xlu0 %1377
          %v1380 = vadd.f32 %v1376, %v1378
          %v1381 = vld [vmem:[#allocation3] sm:$0xff]
          %1383 = vrot.lane.b32.xlu0 %v1381, 96
          %v1384 = vpop.permute.xlu0 %1383
          %v1386 = vadd.f32 %v1381, %v1384
          %1387 = vrot.lane.b32.xlu0 %v1381, 64
          %v1388 = vpop.permute.xlu0 %1387
          %v1390 = vadd.f32 %v1386, %v1388
          %1391 = vrot.lane.b32.xlu0 %v1381, 32
          %v1392 = vpop.permute.xlu0 %1391
          %v1394 = vadd.f32 %v1390, %v1392
          %v1395 = vmul.f32 %v1380, 0.0078125
          %v1396 = vmul.f32 %v1380, %v1395
          %v1397 = vsub.f32 %v1394, %v1396
          %v1398 = vmax.f32 %v1397, 0.0
          %v1399 = vmul.f32 %v1398, 0.007874016
          %v1400 = vrsqrt.pop %v1399
          %v1401 = vmul.f32 %v1399, %v1400
          %vm1402 = vcmp.eq.f32.partialorder %v1399, inf
          %v1403 = vsel %vm1402, %v1399, %v1401
          %vm1404 = vcmp.eq.f32.partialorder %v1399, 0.0
          %v1405 = vand.u32 %v1399, 2147483648
          %v1406 = vsel %vm1404, %v1405, %v1403
          %v1407 = vld [vmem:[%s5] sm:$0xff]
          %v1408 = vld [vmem:[%s5 + $0x8] sm:$0xff]
          %v1409 = vld [vmem:[%s5 + $0x10] sm:$0xff]
          %v1410 = vld [vmem:[%s5 + $0x18] sm:$0xff]
          %v1411 = vld [vmem:[%s6] sm:$0xff]
          %v1412 = vld [vmem:[%s6 + $0x8] sm:$0xff]
          %v1413 = vld [vmem:[%s6 + $0x10] sm:$0xff]
          %v1414 = vld [vmem:[%s6 + $0x18] sm:$0xff]
          %vm1415 = vcmask 261120
          %v1417 = vsel %vm1415, %v1406, 0
          %1419 = vmatprep.subr.mxu0 0.0
          %1420 = vmatpush1.msra.mxu0 %v1411
          %1421 = vmatprep.subr.mxu0 0.0
          %1422 = vmatpush1.msra.mxu0 %v1412
          %1423 = vmatprep.subr.mxu0 0.0
          %1424 = vmatpush1.msra.mxu0 %v1413
          %1425 = vmatprep.subr.mxu0 0.0
          %1426 = vmatpush1.msra.mxu0 %v1414
          %1427 = vmatprep.subr.mxu0 0.0
          %1428 = vmatpush1.msra.mxu0 0.0
          %1429 = vmatprep.subr.mxu0 0.0
          %1430 = vmatpush1.msra.mxu0 0.0
          %1431 = vmatprep.subr.mxu0 0.0
          %1432 = vmatpush1.msra.mxu0 0.0
          %1433 = vmatprep.subr.mxu0 0.0
          %1434 = vmatpush1.msra.mxu0 0.0
          %1435 = vmatprep.subr.mxu0 0.0
          %1436 = vmatpush1.msra.mxu0 0.0
          %1437 = vmatprep.subr.mxu0 0.0
          %1438 = vmatpush1.msra.mxu0 0.0
          %1439 = vmatprep.subr.mxu0 0.0
          %1440 = vmatpush1.msra.mxu0 0.0
          %1441 = vmatprep.subr.mxu0 0.0
          %1442 = vmatpush1.msra.mxu0 0.0
          %1443 = vmatprep.subr.mxu0 0.0
          %1444 = vmatpush1.msra.mxu0 0.0
          %1445 = vmatprep.subr.mxu0 0.0
          %1446 = vmatpush1.msra.mxu0 0.0
          %1447 = vmatprep.subr.mxu0 0.0
          %1448 = vmatpush1.msra.mxu0 0.0
          %1449 = vmatprep.subr.mxu0 0.0
          %1450 = vmatpush1.msra.mxu0 0.0
          %1451 = vmatprep.subr.mxu0 0.0
          %1452 = vmatpush1.msra.mxu0 0.0
          %1453 = vmatprep.subr.mxu0 0.0
          %1454 = vmatpush1.msra.mxu0 0.0
          %1455 = vmatprep.subr.mxu0 0.0
          %1456 = vmatpush1.msra.mxu0 0.0
          %1457 = vmatprep.subr.mxu0 0.0
          %1458 = vmatpush1.msra.mxu0 0.0
          %1459 = vmatprep.subr.mxu0 0.0
          %1460 = vmatpush1.msra.mxu0 0.0
          %1461 = vmatprep.subr.mxu0 0.0
          %1462 = vmatpush1.msra.mxu0 0.0
          %1463 = vmatprep.subr.mxu0 0.0
          %1464 = vmatpush1.msra.mxu0 0.0
          %1465 = vmatprep.subr.mxu0 0.0
          %1466 = vmatpush1.msra.mxu0 0.0
          %1467 = vmatprep.subr.mxu0 0.0
          %1468 = vmatpush1.msra.mxu0 0.0
          %1469 = vmatprep.subr.mxu0 0.0
          %1470 = vmatpush1.msra.mxu0 0.0
          %1471 = vmatprep.subr.mxu0 0.0
          %1472 = vmatpush1.msra.mxu0 0.0
          %1473 = vmatprep.subr.mxu0 0.0
          %1474 = vmatpush1.msra.mxu0 0.0
          %1475 = vmatprep.subr.mxu0 0.0
          %1476 = vmatpush1.msra.mxu0 0.0
          %1477 = vmatprep.subr.mxu0 0.0
          %1478 = vmatpush1.msra.mxu0 0.0
          %1479 = vmatprep.subr.mxu0 0.0
          %1480 = vmatpush1.msra.mxu0 0.0
          %1481 = vmatprep.subr.mxu0 0.0
          %1482 = vmatpush1.msra.mxu0 0.0
          %1483 = vmatprep.mubr.f32.mxu0 0.0
          %1484 = vmatmul.mubr.f32.gmra.mrb[0].mxu0 %v1417
          %v1485 = vpop.f32.mrb[0].mxu0
          %v1486 = vadd.f32 0.0, %v1485
          %v1487 = vpop.f32.mrb[0].mxu0
          %1488 = vdwg.mxu0
          %v1490 = vsel %vm1415, %v1395, 0
          %1492 = vmatprep.subr.mxu0 0.0
          %1493 = vmatpush1.msra.mxu0 %v1407
          %1494 = vmatprep.subr.mxu0 0.0
          %1495 = vmatpush1.msra.mxu0 %v1408
          %1496 = vmatprep.subr.mxu0 0.0
          %1497 = vmatpush1.msra.mxu0 %v1409
          %1498 = vmatprep.subr.mxu0 0.0
          %1499 = vmatpush1.msra.mxu0 %v1410
          %1500 = vmatprep.subr.mxu0 0.0
          %1501 = vmatpush1.msra.mxu0 0.0
          %1502 = vmatprep.subr.mxu0 0.0
          %1503 = vmatpush1.msra.mxu0 0.0
          %1504 = vmatprep.subr.mxu0 0.0
          %1505 = vmatpush1.msra.mxu0 0.0
          %1506 = vmatprep.subr.mxu0 0.0
          %1507 = vmatpush1.msra.mxu0 0.0
          %1508 = vmatprep.subr.mxu0 0.0
          %1509 = vmatpush1.msra.mxu0 0.0
          %1510 = vmatprep.subr.mxu0 0.0
          %1511 = vmatpush1.msra.mxu0 0.0
          %1512 = vmatprep.subr.mxu0 0.0
          %1513 = vmatpush1.msra.mxu0 0.0
          %1514 = vmatprep.subr.mxu0 0.0
          %1515 = vmatpush1.msra.mxu0 0.0
          %1516 = vmatprep.subr.mxu0 0.0
          %1517 = vmatpush1.msra.mxu0 0.0
          %1518 = vmatprep.subr.mxu0 0.0
          %1519 = vmatpush1.msra.mxu0 0.0
          %1520 = vmatprep.subr.mxu0 0.0
          %1521 = vmatpush1.msra.mxu0 0.0
          %1522 = vmatprep.subr.mxu0 0.0
          %1523 = vmatpush1.msra.mxu0 0.0
          %1524 = vmatprep.subr.mxu0 0.0
          %1525 = vmatpush1.msra.mxu0 0.0
          %1526 = vmatprep.subr.mxu0 0.0
          %1527 = vmatpush1.msra.mxu0 0.0
          %1528 = vmatprep.subr.mxu0 0.0
          %1529 = vmatpush1.msra.mxu0 0.0
          %1530 = vmatprep.subr.mxu0 0.0
          %1531 = vmatpush1.msra.mxu0 0.0
          %1532 = vmatprep.subr.mxu0 0.0
          %1533 = vmatpush1.msra.mxu0 0.0
          %1534 = vmatprep.subr.mxu0 0.0
          %1535 = vmatpush1.msra.mxu0 0.0
          %1536 = vmatprep.subr.mxu0 0.0
          %1537 = vmatpush1.msra.mxu0 0.0
          %1538 = vmatprep.subr.mxu0 0.0
          %1539 = vmatpush1.msra.mxu0 0.0
          %1540 = vmatprep.subr.mxu0 0.0
          %1541 = vmatpush1.msra.mxu0 0.0
          %1542 = vmatprep.subr.mxu0 0.0
          %1543 = vmatpush1.msra.mxu0 0.0
          %1544 = vmatprep.subr.mxu0 0.0
          %1545 = vmatpush1.msra.mxu0 0.0
          %1546 = vmatprep.subr.mxu0 0.0
          %1547 = vmatpush1.msra.mxu0 0.0
          %1548 = vmatprep.subr.mxu0 0.0
          %1549 = vmatpush1.msra.mxu0 0.0
          %1550 = vmatprep.subr.mxu0 0.0
          %1551 = vmatpush1.msra.mxu0 0.0
          %1552 = vmatprep.subr.mxu0 0.0
          %1553 = vmatpush1.msra.mxu0 0.0
          %1554 = vmatprep.subr.mxu0 0.0
          %1555 = vmatpush1.msra.mxu0 0.0
          %1556 = vmatprep.mubr.f32.mxu0 0.0
          %1557 = vmatmul.mubr.f32.gmra.mrb[0].mxu0 %v1490
          %v1558 = vpop.f32.mrb[0].mxu0
          %v1559 = vadd.f32 %v1486, %v1558
          %v1560 = vpop.f32.mrb[0].mxu0
          %1561 = vdwg.mxu0
          %v1562 = vld [vmem:[%s7] sm:$0x1]
          %v1564 = vlaneseq
          %v1565 = vshrl.u32 %v1564, 7
          %v1566 = vsub.s32 0, %v1565
          %v1567 = vrot.slane %v1562, %v1566
          %v1569 = vadd.f32 %v1559, %v1567
          %v1570 = vmul.f32 %v1569, 0.5
          %v1571 = vmul.f32 %v1569, 0.70710677
          %v1572 = vand.u32 2147483647, %v1571
          %v1573 = vmul.f32 %v1572, 0.3275911
          %v1574 = vadd.f32 %v1573, 1.0
          %v1575 = vrcp.pop %v1574
          %v1576 = vmul.f32 1.0, %v1575
          %v1577 = vmul.f32 %v1576, 1.0614054
          %v1578 = vadd.f32 %v1577, -1.4531521
          %v1579 = vmul.f32 %v1578, %v1576
          %v1580 = vadd.f32 %v1579, 1.4214138
          %v1581 = vmul.f32 %v1580, %v1576
          %v1582 = vadd.f32 %v1581, -0.28449672
          %v1583 = vmul.f32 %v1582, %v1576
          %v1584 = vadd.f32 %v1583, 0.2548296
          %v1585 = vmul.f32 %v1584, %v1576
          %v1586 = vmul.f32 %v1572, %v1572
          %v1587 = vsub.f32 0.0, %v1586
          %v1588 = vmul.f32 %v1587, 1.442695
          %v1589 = vpow.pop %v1588
          %v1590 = vmul.f32 %v1585, %v1589
          %v1591 = vsub.f32 1.0, %v1590
          %vm1592 = vcmp.lt.f32.partialorder %v1571, 0.0
          %v1593 = vsub.f32 0.0, %v1591
          %v1594 = vsel %vm1592, %v1593, %v1591
          %v1595 = vadd.f32 %v1594, 1.0
          %v1596 = vmul.f32 %v1570, %v1595
          %v1597 = vld [vmem:[%s8] sm:$0xff]
          %v1598 = vld [vmem:[%s8 + $0x8] sm:$0xff]
          %v1599 = vld [vmem:[%s8 + $0x10] sm:$0xff]
          %v1600 = vld [vmem:[%s8 + $0x18] sm:$0xff]
          %v1601 = vld [vmem:[%s9] sm:$0x1]
          %v1603 = vlaneseq
          %v1604 = vshrl.u32 %v1603, 7
          %v1605 = vsub.s32 0, %v1604
          %v1606 = vrot.slane %v1601, %v1605
          %v1609 = vsel %vm1415, %v1596, 0
          %1611 = vmatprep.subr.mxu0 0.0
          %1612 = vmatpush1.msra.mxu0 %v1597
          %1613 = vmatprep.subr.mxu0 0.0
          %1614 = vmatpush1.msra.mxu0 %v1598
          %1615 = vmatprep.subr.mxu0 0.0
          %1616 = vmatpush1.msra.mxu0 %v1599
          %1617 = vmatprep.subr.mxu0 0.0
          %1618 = vmatpush1.msra.mxu0 %v1600
          %1619 = vmatprep.subr.mxu0 0.0
          %1620 = vmatpush1.msra.mxu0 0.0
          %1621 = vmatprep.subr.mxu0 0.0
          %1622 = vmatpush1.msra.mxu0 0.0
          %1623 = vmatprep.subr.mxu0 0.0
          %1624 = vmatpush1.msra.mxu0 0.0
          %1625 = vmatprep.subr.mxu0 0.0
          %1626 = vmatpush1.msra.mxu0 0.0
          %1627 = vmatprep.subr.mxu0 0.0
          %1628 = vmatpush1.msra.mxu0 0.0
          %1629 = vmatprep.subr.mxu0 0.0
          %1630 = vmatpush1.msra.mxu0 0.0
          %1631 = vmatprep.subr.mxu0 0.0
          %1632 = vmatpush1.msra.mxu0 0.0
          %1633 = vmatprep.subr.mxu0 0.0
          %1634 = vmatpush1.msra.mxu0 0.0
          %1635 = vmatprep.subr.mxu0 0.0
          %1636 = vmatpush1.msra.mxu0 0.0
          %1637 = vmatprep.subr.mxu0 0.0
          %1638 = vmatpush1.msra.mxu0 0.0
          %1639 = vmatprep.subr.mxu0 0.0
          %1640 = vmatpush1.msra.mxu0 0.0
          %1641 = vmatprep.subr.mxu0 0.0
          %1642 = vmatpush1.msra.mxu0 0.0
          %1643 = vmatprep.subr.mxu0 0.0
          %1644 = vmatpush1.msra.mxu0 0.0
          %1645 = vmatprep.subr.mxu0 0.0
          %1646 = vmatpush1.msra.mxu0 0.0
          %1647 = vmatprep.subr.mxu0 0.0
          %1648 = vmatpush1.msra.mxu0 0.0
          %1649 = vmatprep.subr.mxu0 0.0
          %1650 = vmatpush1.msra.mxu0 0.0
          %1651 = vmatprep.subr.mxu0 0.0
          %1652 = vmatpush1.msra.mxu0 0.0
          %1653 = vmatprep.subr.mxu0 0.0
          %1654 = vmatpush1.msra.mxu0 0.0
          %1655 = vmatprep.subr.mxu0 0.0
          %1656 = vmatpush1.msra.mxu0 0.0
          %1657 = vmatprep.subr.mxu0 0.0
          %1658 = vmatpush1.msra.mxu0 0.0
          %1659 = vmatprep.subr.mxu0 0.0
          %1660 = vmatpush1.msra.mxu0 0.0
          %1661 = vmatprep.subr.mxu0 0.0
          %1662 = vmatpush1.msra.mxu0 0.0
          %1663 = vmatprep.subr.mxu0 0.0
          %1664 = vmatpush1.msra.mxu0 0.0
          %1665 = vmatprep.subr.mxu0 0.0
          %1666 = vmatpush1.msra.mxu0 0.0
          %1667 = vmatprep.subr.mxu0 0.0
          %1668 = vmatpush1.msra.mxu0 0.0
          %1669 = vmatprep.subr.mxu0 0.0
          %1670 = vmatpush1.msra.mxu0 0.0
          %1671 = vmatprep.subr.mxu0 0.0
          %1672 = vmatpush1.msra.mxu0 0.0
          %1673 = vmatprep.subr.mxu0 0.0
          %1674 = vmatpush1.msra.mxu0 0.0
          %1675 = vmatprep.mubr.f32.mxu0 0.0
          %1676 = vmatmul.mubr.f32.gmra.mrb[0].mxu0 %v1609
          %v1677 = vpop.f32.mrb[0].mxu0
          %v1678 = vadd.f32 %v1606, %v1677
          %v1679 = vpop.f32.mrb[0].mxu0
          %1680 = vdwg.mxu0
          %v1681 = vmul.f32 %v1678, 0.5
          %v1682 = vmul.f32 %v1678, 0.70710677
          %v1683 = vand.u32 2147483647, %v1682
          %v1684 = vmul.f32 %v1683, 0.3275911
          %v1685 = vadd.f32 %v1684, 1.0
          %v1686 = vrcp.pop %v1685
          %v1687 = vmul.f32 1.0, %v1686
          %v1688 = vmul.f32 %v1687, 1.0614054
          %v1689 = vadd.f32 %v1688, -1.4531521
          %v1690 = vmul.f32 %v1689, %v1687
          %v1691 = vadd.f32 %v1690, 1.4214138
          %v1692 = vmul.f32 %v1691, %v1687
          %v1693 = vadd.f32 %v1692, -0.28449672
          %v1694 = vmul.f32 %v1693, %v1687
          %v1695 = vadd.f32 %v1694, 0.2548296
          %v1696 = vmul.f32 %v1695, %v1687
          %v1697 = vmul.f32 %v1683, %v1683
          %v1698 = vsub.f32 0.0, %v1697
          %v1699 = vmul.f32 %v1698, 1.442695
          %v1700 = vpow.pop %v1699
          %v1701 = vmul.f32 %v1696, %v1700
          %v1702 = vsub.f32 1.0, %v1701
          %vm1703 = vcmp.lt.f32.partialorder %v1682, 0.0
          %v1704 = vsub.f32 0.0, %v1702
          %v1705 = vsel %vm1703, %v1704, %v1702
          %v1706 = vadd.f32 %v1705, 1.0
          %v1707 = vmul.f32 %v1681, %v1706
          %v1708 = vld [vmem:[%s10] sm:$0x1]
          %v1710 = vlaneseq
          %v1711 = vshrl.u32 %v1710, 7
          %v1712 = vsub.s32 0, %v1711
          %v1713 = vrot.slane %v1708, %v1712
          %v1715 = vmul.f32 %v1707, %v1713
          %v1716 = vsel %vm1415, %v1715, 0.0
          %1717 = vadd.xlane.f32.xlu0 %v1716
          %v1718 = vpop.xlane.xlu0 %1717
          %v1719 = vld [vmem:[#allocation4] sm:$0x1]
          %v1721 = vlaneseq
          %v1722 = vshrl.u32 %v1721, 7
          %v1723 = vsub.s32 0, %v1722
          %v1724 = vrot.slane %v1719, %v1723
          %v1726 = vadd.f32 %v1718, %v1724
          %vm1727 = vcmask 7168
          %1728 = vst.msk [vmem:[%s935] sm:$0xff] %vm1727, %v1726
        $region244: #{prediction_head.1} parent=215 // pred_fallthru
          _
        %p1729 = scmp.lt.s32.totalorder %s30, 1
        %s1730 = scalar_select %p1729, %s30, 1
        %s1731 = smul.addr %s1730, 8
        %s1732 = scalar_lea.vmem %s12, %s1731
        // Predicated region
        $region245: #{prediction_head.1} parent=215 // pred_check
          %p1733 = pneg %p336
        $region246: #{prediction_head.1} parent=215 // pred_check_branch
          %1735 = sbr.rel (%p1733) target = $region248
        $region247: #{prediction_head.1} parent=215 // pred_region
          _
        $region248: #{prediction_head.1} parent=215 // pred_fallthru
          _
      $region216: #{prediction_head.1} parent=5 // pred_fallthru
        _
      %p1736 = scmp.le.s32.totalorder 2, %s21
      // Predicated region
      $region249: #{prediction_head.1} parent=5 // pred_check
        %p1737 = pneg %p1736
      $region250: #{prediction_head.1} parent=5 // pred_check_branch
        %1739 = sbr.rel (%p1737) target = $region252
      $region251: #{prediction_head.1} parent=5 // pred_region
        %s1740 = ssub.s32 %s21, 2
        // Predicated region
        $region253: #{prediction_head.1} parent=251 // pred_check
          %p1741 = pneg %p342
        $region254: #{prediction_head.1} parent=251 // pred_check_branch
          %1743 = sbr.rel (%p1741) target = $region256
        $region255: #{prediction_head.1} parent=251 // pred_region
          %p1744 = scmp.lt.s32.totalorder %s32, 1
          %s1745 = scalar_select %p1744, %s32, 1
          %s1746 = smul.addr %s1745, 8
          %s1747 = scalar_lea.vmem %s12, %s1746
        $region256: #{prediction_head.1} parent=251 // pred_fallthru
          _
      $region252: #{prediction_head.1} parent=5 // pred_fallthru
        _
    $region6: #{prediction_head.1} parent=1 // loop_footer
      %s25 = sadd.s32 1, %s21
    $region7: #{prediction_head.1} parent=1 // loop_footer_branch
      %20 = sbr.rel target = $region3
    $region8: #{prediction_head.1} parent=1 // loop_exit
      _
    %1748 = vsyncpa [#allocation6], 1
    %s1749 = scalar_lea.sflag [#allocation6], 1
    %1750 = vsyncpa %s1749, 1

</llo_original>
